<compile_context>
chip_gen: v5e
topology: v5e:2x2
jax: 0.10.0
libtpu: 0.0.40
codegen_flags: <defaults>
</compile_context>

<pallas_src>
import jax
import jax.numpy as jnp
from jax.experimental import pallas as pl
from jax.experimental.pallas import tpu as pltpu

K_IN = 28 * 28            # 784 (full-extent last dim of x; legal block dim even though != k*128)
H1, H2, H3 = 512, 256, 128
OUT_REAL = 10
OUT_PAD = 128             # lane-dense output width
TB_MAX = 2048             # batch tile cap (v6e sweet spot; safe on v7x with the VMEM limit below)
NEG_BIG = -1e30           # padded-logit bias; exp(NEG_BIG - m) == 0 in f32
VMEM_LIMIT = 48 * 1024 * 1024   # explicit scoped-VMEM budget with headroom (working set ~29 MiB @ TB=2048)


def _round_up(x, m):
    return (x + m - 1) // m * m


def _cdiv(a, b):
    return -(-a // b)


def _choose_batch_tile(n):
    """Batch tile: multiple of 16, <= TB_MAX, >= 2 grid steps when possible (v7x megacore),
    remainder spread evenly; falls back to a single full-batch block for tiny n."""
    steps = max(2, _cdiv(n, TB_MAX))
    tb = min(_round_up(_cdiv(n, steps), 16), TB_MAX)
    if tb >= n:
        return n          # single block equal to the full batch dim (always a legal block shape)
    return tb


def fcnn_kernel(x_ref, w1_ref, b1_ref, w2_ref, b2_ref, w3_ref, b3_ref,
                w4_ref, b4_ref, o_ref):
    # x tile arrives as f32 straight from HBM; cast to bf16 here (VPU, hidden under MXU work).
    x = x_ref[...].astype(jnp.bfloat16)                                # (TB, 784) bf16

    # dropout1 (p=0.25) -> identity in eval mode
    h1 = jnp.dot(x, w1_ref[...], preferred_element_type=jnp.float32) + b1_ref[...]
    h1 = jnp.maximum(h1, 0.0).astype(jnp.bfloat16)                     # (TB, 512)

    h2 = jnp.dot(h1, w2_ref[...], preferred_element_type=jnp.float32) + b2_ref[...]
    h2 = jnp.maximum(h2, 0.0).astype(jnp.bfloat16)                     # (TB, 256)

    # dropout2 (p=0.5) -> identity in eval mode
    h3 = jnp.dot(h2, w3_ref[...], preferred_element_type=jnp.float32) + b3_ref[...]
    h3 = jnp.maximum(h3, 0.0).astype(jnp.bfloat16)                     # (TB, 128)

    logits = jnp.dot(h3, w4_ref[...], preferred_element_type=jnp.float32) + b4_ref[...]
    # logits: (TB, 128) f32; columns 10..127 hold ~ -1e30 and drop out of the softmax.

    # log_softmax over the lane-dense 128-wide logits (exact for the first 10 columns)
    m = jnp.max(logits, axis=-1, keepdims=True)
    z = logits - m
    lse = jnp.log(jnp.sum(jnp.exp(z), axis=-1, keepdims=True))
    o_ref[...] = z - lse


@jax.jit
def fcnn_forward(x_nchw, params):
    w1, b1, w2, b2, w3, b3, w4, b4 = params
    n = x_nchw.shape[0]
    # nn.Flatten: NCHW -> (N, 784). No padding, no dtype change, no extra HBM copy of x.
    x_flat = x_nchw.reshape(n, K_IN).astype(jnp.float32)

    tb = _choose_batch_tile(n)
    grid = (_cdiv(n, tb),)        # ragged last block handled by Pallas (masked store, sliced below)

    # Weights as bf16 MXU operands (cast once); biases f32; fc4 padded lane-dense to 128 cols.
    w1p = w1.astype(jnp.bfloat16)                                              # (784, 512)
    w2p = w2.astype(jnp.bfloat16)                                              # (512, 256)
    w3p = w3.astype(jnp.bfloat16)                                              # (256, 128)
    w4p = jnp.pad(w4, ((0, 0), (0, OUT_PAD - OUT_REAL))).astype(jnp.bfloat16)  # (128, 128)
    b1p = b1.astype(jnp.float32)
    b2p = b2.astype(jnp.float32)
    b3p = b3.astype(jnp.float32)
    b4p = jnp.pad(b4.astype(jnp.float32), ((0, 0), (0, OUT_PAD - OUT_REAL)),
                  constant_values=NEG_BIG)                                      # (1, 128)

    def resident(shape):
        # Constant index_map -> block never changes -> stays VMEM-resident across grid steps.
        # (Single-buffering via pipeline_mode would shave ~1 MiB more; not needed within budget.)
        nd = len(shape)
        return pl.BlockSpec(shape, lambda i, _nd=nd: (0,) * _nd)

    weight_bytes = (K_IN * H1 + H1 * H2 + H2 * H3 + H3 * OUT_PAD) * 2 \
                   + (H1 + H2 + H3 + OUT_PAD) * 4
    cost = pl.CostEstimate(
        flops=2 * n * (K_IN * H1 + H1 * H2 + H2 * H3 + H3 * OUT_PAD),
        transcendentals=n * (OUT_PAD + 1),
        bytes_accessed=n * (K_IN * 4 + OUT_PAD * 4) + weight_bytes,
    )

    out = pl.pallas_call(
        fcnn_kernel,
        out_shape=jax.ShapeDtypeStruct((n, OUT_PAD), jnp.float32),
        grid=grid,
        in_specs=[
            pl.BlockSpec((tb, K_IN), lambda i: (i, 0)),        # x: batch-tiled, pipelined DMA
            resident(w1p.shape), resident(b1p.shape),          # weights/biases: VMEM-resident
            resident(w2p.shape), resident(b2p.shape),
            resident(w3p.shape), resident(b3p.shape),
            resident(w4p.shape), resident(b4p.shape),
        ],
        out_specs=pl.BlockSpec((tb, OUT_PAD), lambda i: (i, 0)),
        compiler_params=pltpu.CompilerParams(
            dimension_semantics=("parallel",),                  # shard batch grid across TCs (v7x)
            vmem_limit_bytes=VMEM_LIMIT,
        ),
        cost_estimate=cost,
    )(x_flat, w1p, b1p, w2p, b2p, w3p, b3p, w4p, b4p)

    return out[:, :OUT_REAL]                                    # (N, 10) log-probs


def init_params(key):
    """Deterministic init matching nn.Linear shapes; W stored as (in, out), f32."""
    dims = [(K_IN, H1), (H1, H2), (H2, H3), (H3, OUT_REAL)]
    params = []
    for i, (fan_in, fan_out) in enumerate(dims):
        kw, kb = jax.random.split(jax.random.fold_in(key, i))
        bound = 1.0 / jnp.sqrt(fan_in)
        w = jax.random.uniform(kw, (fan_in, fan_out), jnp.float32, -bound, bound)
        b = jax.random.uniform(kb, (1, fan_out), jnp.float32, -bound, bound)
        params += [w, b]
    return tuple(params)


def reference_forward(x_nchw, params):
    """Pure-JAX f32 reference of the PyTorch forward (dropout = identity in eval)."""
    w1, b1, w2, b2, w3, b3, w4, b4 = params
    x = x_nchw.reshape(x_nchw.shape[0], -1).astype(jnp.float32)
    h = jnp.maximum(x @ w1 + b1, 0.0)
    h = jnp.maximum(h @ w2 + b2, 0.0)
    h = jnp.maximum(h @ w3 + b3, 0.0)
    logits = h @ w4 + b4
    return jax.nn.log_softmax(logits, axis=1)


if __name__ == "__main__":
    key = jax.random.PRNGKey(0)
    k_x, k_p = jax.random.split(key)
    params = init_params(k_p)

    # Small MNIST-like batch: (N=2, C=1, H=28, W=28), NCHW like PyTorch.
    x = jax.random.normal(k_x, (2, 1, 28, 28), jnp.float32)
    out = jax.block_until_ready(fcnn_forward(x, params))
    ref = reference_forward(x, params)
    assert out.shape == (2, OUT_REAL)
    # Loose tolerance: kernel uses bf16 matmul operands (f32 accumulation); reference is pure f32.
    assert jnp.allclose(out, ref, atol=5e-2, rtol=5e-2), "mismatch vs JAX reference (n=2)"

    # Also exercise a multi-step grid with a ragged last batch tile (n not a multiple of tb).
    x2 = jax.random.normal(jax.random.fold_in(k_x, 1), (50, 1, 28, 28), jnp.float32)
    out2 = jax.block_until_ready(fcnn_forward(x2, params))
    ref2 = reference_forward(x2, params)
    assert out2.shape == (50, OUT_REAL)
    assert jnp.allclose(out2, ref2, atol=5e-2, rtol=5e-2), "mismatch vs JAX reference (n=50)"

    print("KERNEL_OK")
</pallas_src>

<mosaic_0001>
module attributes {stable_mosaic.version = 11 : i64} {
  func.func @fcnn_kernel(%arg0: i32, %arg1: memref<2x784xf32, #tpu.memory_space<vmem>>, %arg2: memref<784x512xbf16, #tpu.memory_space<vmem>>, %arg3: memref<1x512xf32, #tpu.memory_space<vmem>>, %arg4: memref<512x256xbf16, #tpu.memory_space<vmem>>, %arg5: memref<1x256xf32, #tpu.memory_space<vmem>>, %arg6: memref<256x128xbf16, #tpu.memory_space<vmem>>, %arg7: memref<1x128xf32, #tpu.memory_space<vmem>>, %arg8: memref<128x128xbf16, #tpu.memory_space<vmem>>, %arg9: memref<1x128xf32, #tpu.memory_space<vmem>>, %arg10: memref<2x128xf32, #tpu.memory_space<vmem>>) attributes {dimension_semantics = [#tpu.dimension_semantics<parallel>], iteration_bounds = array<i64: 1>, scalar_prefetch = 0 : i64, scratch_operands = 0 : i64, tpu.core_type = #tpu.core_type<tc>, window_params = [{transform_indices = @transform_0, window_bounds = array<i64: 2, 784>}, {pipeline_mode = #tpu.pipeline_mode<synchronous>, transform_indices = @transform_1, window_bounds = array<i64: 784, 512>}, {pipeline_mode = #tpu.pipeline_mode<synchronous>, transform_indices = @transform_2, window_bounds = array<i64: 1, 512>}, {pipeline_mode = #tpu.pipeline_mode<synchronous>, transform_indices = @transform_3, window_bounds = array<i64: 512, 256>}, {pipeline_mode = #tpu.pipeline_mode<synchronous>, transform_indices = @transform_4, window_bounds = array<i64: 1, 256>}, {pipeline_mode = #tpu.pipeline_mode<synchronous>, transform_indices = @transform_5, window_bounds = array<i64: 256, 128>}, {pipeline_mode = #tpu.pipeline_mode<synchronous>, transform_indices = @transform_6, window_bounds = array<i64: 1, 128>}, {pipeline_mode = #tpu.pipeline_mode<synchronous>, transform_indices = @transform_7, window_bounds = array<i64: 128, 128>}, {pipeline_mode = #tpu.pipeline_mode<synchronous>, transform_indices = @transform_8, window_bounds = array<i64: 1, 128>}, {transform_indices = @transform_9, window_bounds = array<i64: 2, 128>}]} {
    %c0 = arith.constant 0 : index
    %c0_0 = arith.constant 0 : index
    %0 = vector.load %arg1[%c0, %c0_0] : memref<2x784xf32, #tpu.memory_space<vmem>>, vector<2x784xf32>
    %1 = arith.truncf %0 : vector<2x784xf32> to vector<2x784xbf16>
    %c0_1 = arith.constant 0 : index
    %c0_2 = arith.constant 0 : index
    %2 = vector.load %arg2[%c0_1, %c0_2] : memref<784x512xbf16, #tpu.memory_space<vmem>>, vector<784x512xbf16>
    %cst = arith.constant dense<0.000000e+00> : vector<2x512xf32>
    %3 = tpu.matmul %1, %2, %cst {dimension_numbers = #tpu.dot_dimension_numbers<[1], [0], [0], [1], [0, 0, 1, 1], [], []>} : vector<2x784xbf16>, vector<784x512xbf16>, vector<2x512xf32> -> vector<2x512xf32>
    %c0_3 = arith.constant 0 : index
    %c0_4 = arith.constant 0 : index
    %4 = vector.load %arg3[%c0_3, %c0_4] : memref<1x512xf32, #tpu.memory_space<vmem>>, vector<1x512xf32>
    %5 = vector.broadcast %4 : vector<1x512xf32> to vector<2x512xf32>
    %6 = arith.addf %3, %5 : vector<2x512xf32>
    %cst_5 = arith.constant 0.000000e+00 : f32
    %7 = vector.broadcast %cst_5 : f32 to vector<2x512xf32>
    %8 = arith.maximumf %6, %7 : vector<2x512xf32>
    %9 = arith.truncf %8 : vector<2x512xf32> to vector<2x512xbf16>
    %c0_6 = arith.constant 0 : index
    %c0_7 = arith.constant 0 : index
    %10 = vector.load %arg4[%c0_6, %c0_7] : memref<512x256xbf16, #tpu.memory_space<vmem>>, vector<512x256xbf16>
    %cst_8 = arith.constant dense<0.000000e+00> : vector<2x256xf32>
    %11 = tpu.matmul %9, %10, %cst_8 {dimension_numbers = #tpu.dot_dimension_numbers<[1], [0], [0], [1], [0, 0, 1, 1], [], []>} : vector<2x512xbf16>, vector<512x256xbf16>, vector<2x256xf32> -> vector<2x256xf32>
    %c0_9 = arith.constant 0 : index
    %c0_10 = arith.constant 0 : index
    %12 = vector.load %arg5[%c0_9, %c0_10] : memref<1x256xf32, #tpu.memory_space<vmem>>, vector<1x256xf32>
    %13 = vector.broadcast %12 : vector<1x256xf32> to vector<2x256xf32>
    %14 = arith.addf %11, %13 : vector<2x256xf32>
    %cst_11 = arith.constant 0.000000e+00 : f32
    %15 = vector.broadcast %cst_11 : f32 to vector<2x256xf32>
    %16 = arith.maximumf %14, %15 : vector<2x256xf32>
    %17 = arith.truncf %16 : vector<2x256xf32> to vector<2x256xbf16>
    %c0_12 = arith.constant 0 : index
    %c0_13 = arith.constant 0 : index
    %18 = vector.load %arg6[%c0_12, %c0_13] : memref<256x128xbf16, #tpu.memory_space<vmem>>, vector<256x128xbf16>
    %cst_14 = arith.constant dense<0.000000e+00> : vector<2x128xf32>
    %19 = tpu.matmul %17, %18, %cst_14 {dimension_numbers = #tpu.dot_dimension_numbers<[1], [0], [0], [1], [0, 0, 1, 1], [], []>} : vector<2x256xbf16>, vector<256x128xbf16>, vector<2x128xf32> -> vector<2x128xf32>
    %c0_15 = arith.constant 0 : index
    %c0_16 = arith.constant 0 : index
    %20 = vector.load %arg7[%c0_15, %c0_16] : memref<1x128xf32, #tpu.memory_space<vmem>>, vector<1x128xf32>
    %21 = vector.broadcast %20 : vector<1x128xf32> to vector<2x128xf32>
    %22 = arith.addf %19, %21 : vector<2x128xf32>
    %cst_17 = arith.constant 0.000000e+00 : f32
    %23 = vector.broadcast %cst_17 : f32 to vector<2x128xf32>
    %24 = arith.maximumf %22, %23 : vector<2x128xf32>
    %25 = arith.truncf %24 : vector<2x128xf32> to vector<2x128xbf16>
    %c0_18 = arith.constant 0 : index
    %c0_19 = arith.constant 0 : index
    %26 = vector.load %arg8[%c0_18, %c0_19] : memref<128x128xbf16, #tpu.memory_space<vmem>>, vector<128x128xbf16>
    %cst_20 = arith.constant dense<0.000000e+00> : vector<2x128xf32>
    %27 = tpu.matmul %25, %26, %cst_20 {dimension_numbers = #tpu.dot_dimension_numbers<[1], [0], [0], [1], [0, 0, 1, 1], [], []>} : vector<2x128xbf16>, vector<128x128xbf16>, vector<2x128xf32> -> vector<2x128xf32>
    %c0_21 = arith.constant 0 : index
    %c0_22 = arith.constant 0 : index
    %28 = vector.load %arg9[%c0_21, %c0_22] : memref<1x128xf32, #tpu.memory_space<vmem>>, vector<1x128xf32>
    %29 = vector.broadcast %28 : vector<1x128xf32> to vector<2x128xf32>
    %30 = arith.addf %27, %29 : vector<2x128xf32>
    %cst_23 = arith.constant dense<0xFF800000> : vector<2xf32>
    %31 = vector.multi_reduction <maximumf>, %30, %cst_23 [1] : vector<2x128xf32> to vector<2xf32>
    %32 = vector.shape_cast %31 : vector<2xf32> to vector<2x1xf32>
    %33 = vector.broadcast %32 : vector<2x1xf32> to vector<2x128xf32>
    %34 = arith.subf %30, %33 : vector<2x128xf32>
    %35 = math.exp %34 : vector<2x128xf32>
    %cst_24 = arith.constant dense<0.000000e+00> : vector<2xf32>
    %36 = vector.multi_reduction <add>, %35, %cst_24 [1] : vector<2x128xf32> to vector<2xf32>
    %37 = vector.shape_cast %36 : vector<2xf32> to vector<2x1xf32>
    %38 = math.log %37 : vector<2x1xf32>
    %39 = vector.broadcast %38 : vector<2x1xf32> to vector<2x128xf32>
    %40 = arith.subf %34, %39 : vector<2x128xf32>
    %c0_25 = arith.constant 0 : index
    %c0_26 = arith.constant 0 : index
    %41 = vector.load %arg10[%c0_25, %c0_26] : memref<2x128xf32, #tpu.memory_space<vmem>>, vector<2x128xf32>
    tpu.vector_store %arg10[%c0_25, %c0_26], %40 {strides = array<i32>} : memref<2x128xf32, #tpu.memory_space<vmem>>, vector<2x128xf32>,
    return
  }
  func.func @transform_0(%arg0: i32) -> (i32, i32) {
    %c0_i32 = arith.constant 0 : i32
    %c0_i32_0 = arith.constant 0 : i32
    return %arg0, %c0_i32 : i32, i32
  }
  func.func @transform_1(%arg0: i32) -> (i32, i32) {
    %c0_i32 = arith.constant 0 : i32
    %c0_i32_0 = arith.constant 0 : i32
    %c0_i32_1 = arith.constant 0 : i32
    return %c0_i32, %c0_i32_0 : i32, i32
  }
  func.func @transform_2(%arg0: i32) -> (i32, i32) {
    %c0_i32 = arith.constant 0 : i32
    %c0_i32_0 = arith.constant 0 : i32
    %c0_i32_1 = arith.constant 0 : i32
    return %c0_i32, %c0_i32_0 : i32, i32
  }
  func.func @transform_3(%arg0: i32) -> (i32, i32) {
    %c0_i32 = arith.constant 0 : i32
    %c0_i32_0 = arith.constant 0 : i32
    %c0_i32_1 = arith.constant 0 : i32
    return %c0_i32, %c0_i32_0 : i32, i32
  }
  func.func @transform_4(%arg0: i32) -> (i32, i32) {
    %c0_i32 = arith.constant 0 : i32
    %c0_i32_0 = arith.constant 0 : i32
    %c0_i32_1 = arith.constant 0 : i32
    return %c0_i32, %c0_i32_0 : i32, i32
  }
  func.func @transform_5(%arg0: i32) -> (i32, i32) {
    %c0_i32 = arith.constant 0 : i32
    %c0_i32_0 = arith.constant 0 : i32
    %c0_i32_1 = arith.constant 0 : i32
    return %c0_i32, %c0_i32_0 : i32, i32
  }
  func.func @transform_6(%arg0: i32) -> (i32, i32) {
    %c0_i32 = arith.constant 0 : i32
    %c0_i32_0 = arith.constant 0 : i32
    %c0_i32_1 = arith.constant 0 : i32
    return %c0_i32, %c0_i32_0 : i32, i32
  }
  func.func @transform_7(%arg0: i32) -> (i32, i32) {
    %c0_i32 = arith.constant 0 : i32
    %c0_i32_0 = arith.constant 0 : i32
    %c0_i32_1 = arith.constant 0 : i32
    return %c0_i32, %c0_i32_0 : i32, i32
  }
  func.func @transform_8(%arg0: i32) -> (i32, i32) {
    %c0_i32 = arith.constant 0 : i32
    %c0_i32_0 = arith.constant 0 : i32
    %c0_i32_1 = arith.constant 0 : i32
    return %c0_i32, %c0_i32_0 : i32, i32
  }
  func.func @transform_9(%arg0: i32) -> (i32, i32) {
    %c0_i32 = arith.constant 0 : i32
    %c0_i32_0 = arith.constant 0 : i32
    return %arg0, %c0_i32 : i32, i32
  }
}

</mosaic_0001>

<llo_original>
// kernel: fcnn_forward.1
$region0: #{fcnn_forward.1}
  #allocation0 [shape = 'u32[]', space=smem, size = 0x4, offset = 0x4, fixed_abs, tag = 'smem constant byte address 0x4 - core index']
  #allocation1 [shape = 'u32[72,128]{1,0:T(1,128)}', space=vmem, size = 0x9000, scoped, tag = 'internal scratch']
  %s0 = inlined_call_operand.vmem [shape: f32[2,784], index: 0, kind: input, shape index: {}]
  %s1 = inlined_call_operand.vmem [shape: bf16[784,512], index: 1, kind: input, shape index: {}]
  %s2 = inlined_call_operand.vmem [shape: f32[1,512], index: 2, kind: input, shape index: {}]
  %s3 = inlined_call_operand.vmem [shape: bf16[512,256], index: 3, kind: input, shape index: {}]
  %s4 = inlined_call_operand.vmem [shape: f32[1,256], index: 4, kind: input, shape index: {}]
  %s5 = inlined_call_operand.vmem [shape: bf16[256,128], index: 5, kind: input, shape index: {}]
  %s6 = inlined_call_operand.vmem [shape: f32[1,128], index: 6, kind: input, shape index: {}]
  %s7 = inlined_call_operand.vmem [shape: bf16[128,128], index: 7, kind: input, shape index: {}]
  %s8 = inlined_call_operand.vmem [shape: f32[1,128], index: 8, kind: input, shape index: {}]
  %s9 = inlined_call_operand.hbm [shape: f32[2,128], index: 9, kind: output, shape index: {}]
  %s10 = sld [smem:[#allocation0]]
  $region46: #{fcnn_forward.1} parent=0
    _
  %s12 = ssub.s32 1, %s10
  %s13 = scalar_select 0, %s12, %s10
  $region1: #{fcnn_forward.1} parent=0
    #allocation2 [shape = 'u8[1024]{0}', space=vmem, size = 0x400, scoped, tag = 'output window, operand 0, single buffered']
    #allocation3 [shape = 's32[1]{0}', space=sflag, size = 0x4, scoped, tag = 'scoped memory for fcnn_forward.1']
    %14 = vsyncpa [#allocation3], 0
    // Predicated region
    $region2: #{fcnn_forward.1} parent=1 // pred_check
      _
    $region3: #{fcnn_forward.1} parent=1 // pred_check_branch
      %16 = sbr.rel (0) target = $region5
    $region4: #{fcnn_forward.1} parent=1 // pred_region
      _
    $region5: #{fcnn_forward.1} parent=1 // pred_fallthru
      _
    // Predicated region
    $region6: #{fcnn_forward.1} parent=1 // pred_check
      _
    $region7: #{fcnn_forward.1} parent=1 // pred_check_branch
      %18 = sbr.rel (0) target = $region9
    $region8: #{fcnn_forward.1} parent=1 // pred_region
      _
    $region9: #{fcnn_forward.1} parent=1 // pred_fallthru
      _
    // Predicated region
    $region10: #{fcnn_forward.1} parent=1 // pred_check
      _
    $region11: #{fcnn_forward.1} parent=1 // pred_check_branch
      %20 = sbr.rel (0) target = $region13
    $region12: #{fcnn_forward.1} parent=1 // pred_region
      _
    $region13: #{fcnn_forward.1} parent=1 // pred_fallthru
      _
    // Predicated region
    $region14: #{fcnn_forward.1} parent=1 // pred_check
      _
    $region15: #{fcnn_forward.1} parent=1 // pred_check_branch
      %22 = sbr.rel (0) target = $region17
    $region16: #{fcnn_forward.1} parent=1 // pred_region
      _
    $region17: #{fcnn_forward.1} parent=1 // pred_fallthru
      _
    // Predicated region
    $region18: #{fcnn_forward.1} parent=1 // pred_check
      _
    $region19: #{fcnn_forward.1} parent=1 // pred_check_branch
      %24 = sbr.rel (0) target = $region21
    $region20: #{fcnn_forward.1} parent=1 // pred_region
      _
    $region21: #{fcnn_forward.1} parent=1 // pred_fallthru
      _
    // Predicated region
    $region22: #{fcnn_forward.1} parent=1 // pred_check
      _
    $region23: #{fcnn_forward.1} parent=1 // pred_check_branch
      %26 = sbr.rel (0) target = $region25
    $region24: #{fcnn_forward.1} parent=1 // pred_region
      _
    $region25: #{fcnn_forward.1} parent=1 // pred_fallthru
      _
    // Predicated region
    $region26: #{fcnn_forward.1} parent=1 // pred_check
      _
    $region27: #{fcnn_forward.1} parent=1 // pred_check_branch
      %28 = sbr.rel (0) target = $region29
    $region28: #{fcnn_forward.1} parent=1 // pred_region
      _
    $region29: #{fcnn_forward.1} parent=1 // pred_fallthru
      _
    // Predicated region
    $region30: #{fcnn_forward.1} parent=1 // pred_check
      _
    $region31: #{fcnn_forward.1} parent=1 // pred_check_branch
      %30 = sbr.rel (0) target = $region33
    $region32: #{fcnn_forward.1} parent=1 // pred_region
      _
    $region33: #{fcnn_forward.1} parent=1 // pred_fallthru
      _
    // Predicated region
    $region34: #{fcnn_forward.1} parent=1 // pred_check
      _
    $region35: #{fcnn_forward.1} parent=1 // pred_check_branch
      %32 = sbr.rel (0) target = $region37
    $region36: #{fcnn_forward.1} parent=1 // pred_region
      _
    $region37: #{fcnn_forward.1} parent=1 // pred_fallthru
      _
    %v34 = vld [vmem:[%s0] sm:$0xff]
    %v35 = vld [vmem:[%s0 + $0x8] sm:$0x3f]
    %38 = vst [vmem:[#allocation1] ss:$4 sm:$0xff] %v34
    %s39 = scalar_lea.vmem [#allocation1], 32
    %40 = vst [vmem:[%s39] ss:$4 sm:$0xff] %v35
    %v41 = vld.sshfl [vmem:[#allocation1] sm:$0xff pattern:$0x73625140]
    %v42 = vld.sshfl [vmem:[#allocation1 + $0x8] sm:$0xff pattern:$0x73625140]
    %v43 = vld.sshfl [vmem:[#allocation1 + $0x10] sm:$0xff pattern:$0x73625140]
    %v44 = vld.sshfl [vmem:[#allocation1 + $0x18] sm:$0xff pattern:$0x73625140]
    %v45 = vld.sshfl [vmem:[#allocation1 + $0x20] sm:$0xff pattern:$0x73625140]
    %v46 = vld.sshfl [vmem:[#allocation1 + $0x28] sm:$0xff pattern:$0x73625140]
    %v47 = vld.sshfl [vmem:[#allocation1 + $0x30] sm:$0xff pattern:$0x73625140]
    %v55 = vpack.c.bf16 %v41, %v41
    %v56 = vpack.c.bf16 %v42, %v42
    %v57 = vpack.c.bf16 %v43, %v43
    %v58 = vpack.c.bf16 %v44, %v44
    %v59 = vpack.c.bf16 %v45, %v45
    %v60 = vpack.c.bf16 %v46, %v46
    %v61 = vpack.c.bf16 %v47, %v47
    %v62 = vld [vmem:[%s1] sm:$0xff]
    %v63 = vld [vmem:[%s1 + $0x8] sm:$0xff]
    %v64 = vld [vmem:[%s1 + $0x10] sm:$0xff]
    %v65 = vld [vmem:[%s1 + $0x18] sm:$0xff]
    %v66 = vld [vmem:[%s1 + $0x20] sm:$0xff]
    %v67 = vld [vmem:[%s1 + $0x28] sm:$0xff]
    %v68 = vld [vmem:[%s1 + $0x30] sm:$0xff]
    %v69 = vld [vmem:[%s1 + $0x38] sm:$0xff]
    %v70 = vld [vmem:[%s1 + $0x40] sm:$0xff]
    %v71 = vld [vmem:[%s1 + $0x48] sm:$0xff]
    %v72 = vld [vmem:[%s1 + $0x50] sm:$0xff]
    %v73 = vld [vmem:[%s1 + $0x58] sm:$0xff]
    %v74 = vld [vmem:[%s1 + $0x60] sm:$0xff]
    %v75 = vld [vmem:[%s1 + $0x68] sm:$0xff]
    %v76 = vld [vmem:[%s1 + $0x70] sm:$0xff]
    %v77 = vld [vmem:[%s1 + $0x78] sm:$0xff]
    %v78 = vld [vmem:[%s1 + $0x80] sm:$0xff]
    %v79 = vld [vmem:[%s1 + $0x88] sm:$0xff]
    %v80 = vld [vmem:[%s1 + $0x90] sm:$0xff]
    %v81 = vld [vmem:[%s1 + $0x98] sm:$0xff]
    %v82 = vld [vmem:[%s1 + $0xa0] sm:$0xff]
    %v83 = vld [vmem:[%s1 + $0xa8] sm:$0xff]
    %v84 = vld [vmem:[%s1 + $0xb0] sm:$0xff]
    %v85 = vld [vmem:[%s1 + $0xb8] sm:$0xff]
    %v86 = vld [vmem:[%s1 + $0xc0] sm:$0xff]
    %v87 = vld [vmem:[%s1 + $0xc8] sm:$0xff]
    %v88 = vld [vmem:[%s1 + $0xd0] sm:$0xff]
    %v89 = vld [vmem:[%s1 + $0xd8] sm:$0xff]
    %v90 = vld [vmem:[%s1 + $0xe0] sm:$0xff]
    %v91 = vld [vmem:[%s1 + $0xe8] sm:$0xff]
    %v92 = vld [vmem:[%s1 + $0xf0] sm:$0xff]
    %v93 = vld [vmem:[%s1 + $0xf8] sm:$0xff]
    %v94 = vld [vmem:[%s1 + $0x100] sm:$0xff]
    %v95 = vld [vmem:[%s1 + $0x108] sm:$0xff]
    %v96 = vld [vmem:[%s1 + $0x110] sm:$0xff]
    %v97 = vld [vmem:[%s1 + $0x118] sm:$0xff]
    %v98 = vld [vmem:[%s1 + $0x120] sm:$0xff]
    %v99 = vld [vmem:[%s1 + $0x128] sm:$0xff]
    %v100 = vld [vmem:[%s1 + $0x130] sm:$0xff]
    %v101 = vld [vmem:[%s1 + $0x138] sm:$0xff]
    %v102 = vld [vmem:[%s1 + $0x140] sm:$0xff]
    %v103 = vld [vmem:[%s1 + $0x148] sm:$0xff]
    %v104 = vld [vmem:[%s1 + $0x150] sm:$0xff]
    %v105 = vld [vmem:[%s1 + $0x158] sm:$0xff]
    %v106 = vld [vmem:[%s1 + $0x160] sm:$0xff]
    %v107 = vld [vmem:[%s1 + $0x168] sm:$0xff]
    %v108 = vld [vmem:[%s1 + $0x170] sm:$0xff]
    %v109 = vld [vmem:[%s1 + $0x178] sm:$0xff]
    %v110 = vld [vmem:[%s1 + $0x180] sm:$0xff]
    %v111 = vld [vmem:[%s1 + $0x188] sm:$0xff]
    %v112 = vld [vmem:[%s1 + $0x190] sm:$0xff]
    %v113 = vld [vmem:[%s1 + $0x198] sm:$0xff]
    %v114 = vld [vmem:[%s1 + $0x1a0] sm:$0xff]
    %v115 = vld [vmem:[%s1 + $0x1a8] sm:$0xff]
    %v116 = vld [vmem:[%s1 + $0x1b0] sm:$0xff]
    %v117 = vld [vmem:[%s1 + $0x1b8] sm:$0xff]
    %v118 = vld [vmem:[%s1 + $0x1c0] sm:$0xff]
    %v119 = vld [vmem:[%s1 + $0x1c8] sm:$0xff]
    %v120 = vld [vmem:[%s1 + $0x1d0] sm:$0xff]
    %v121 = vld [vmem:[%s1 + $0x1d8] sm:$0xff]
    %v122 = vld [vmem:[%s1 + $0x1e0] sm:$0xff]
    %v123 = vld [vmem:[%s1 + $0x1e8] sm:$0xff]
    %v124 = vld [vmem:[%s1 + $0x1f0] sm:$0xff]
    %v125 = vld [vmem:[%s1 + $0x1f8] sm:$0xff]
    %v126 = vld [vmem:[%s1 + $0x200] sm:$0xff]
    %v127 = vld [vmem:[%s1 + $0x208] sm:$0xff]
    %v128 = vld [vmem:[%s1 + $0x210] sm:$0xff]
    %v129 = vld [vmem:[%s1 + $0x218] sm:$0xff]
    %v130 = vld [vmem:[%s1 + $0x220] sm:$0xff]
    %v131 = vld [vmem:[%s1 + $0x228] sm:$0xff]
    %v132 = vld [vmem:[%s1 + $0x230] sm:$0xff]
    %v133 = vld [vmem:[%s1 + $0x238] sm:$0xff]
    %v134 = vld [vmem:[%s1 + $0x240] sm:$0xff]
    %v135 = vld [vmem:[%s1 + $0x248] sm:$0xff]
    %v136 = vld [vmem:[%s1 + $0x250] sm:$0xff]
    %v137 = vld [vmem:[%s1 + $0x258] sm:$0xff]
    %v138 = vld [vmem:[%s1 + $0x260] sm:$0xff]
    %v139 = vld [vmem:[%s1 + $0x268] sm:$0xff]
    %v140 = vld [vmem:[%s1 + $0x270] sm:$0xff]
    %v141 = vld [vmem:[%s1 + $0x278] sm:$0xff]
    %v142 = vld [vmem:[%s1 + $0x280] sm:$0xff]
    %v143 = vld [vmem:[%s1 + $0x288] sm:$0xff]
    %v144 = vld [vmem:[%s1 + $0x290] sm:$0xff]
    %v145 = vld [vmem:[%s1 + $0x298] sm:$0xff]
    %v146 = vld [vmem:[%s1 + $0x2a0] sm:$0xff]
    %v147 = vld [vmem:[%s1 + $0x2a8] sm:$0xff]
    %v148 = vld [vmem:[%s1 + $0x2b0] sm:$0xff]
    %v149 = vld [vmem:[%s1 + $0x2b8] sm:$0xff]
    %v150 = vld [vmem:[%s1 + $0x2c0] sm:$0xff]
    %v151 = vld [vmem:[%s1 + $0x2c8] sm:$0xff]
    %v152 = vld [vmem:[%s1 + $0x2d0] sm:$0xff]
    %v153 = vld [vmem:[%s1 + $0x2d8] sm:$0xff]
    %v154 = vld [vmem:[%s1 + $0x2e0] sm:$0xff]
    %v155 = vld [vmem:[%s1 + $0x2e8] sm:$0xff]
    %v156 = vld [vmem:[%s1 + $0x2f0] sm:$0xff]
    %v157 = vld [vmem:[%s1 + $0x2f8] sm:$0xff]
    %v158 = vld [vmem:[%s1 + $0x300] sm:$0xff]
    %v159 = vld [vmem:[%s1 + $0x308] sm:$0xff]
    %v160 = vld [vmem:[%s1 + $0x310] sm:$0xff]
    %v161 = vld [vmem:[%s1 + $0x318] sm:$0xff]
    %v162 = vld [vmem:[%s1 + $0x320] sm:$0xff]
    %v163 = vld [vmem:[%s1 + $0x328] sm:$0xff]
    %v164 = vld [vmem:[%s1 + $0x330] sm:$0xff]
    %v165 = vld [vmem:[%s1 + $0x338] sm:$0xff]
    %v166 = vld [vmem:[%s1 + $0x340] sm:$0xff]
    %v167 = vld [vmem:[%s1 + $0x348] sm:$0xff]
    %v168 = vld [vmem:[%s1 + $0x350] sm:$0xff]
    %v169 = vld [vmem:[%s1 + $0x358] sm:$0xff]
    %v170 = vld [vmem:[%s1 + $0x360] sm:$0xff]
    %v171 = vld [vmem:[%s1 + $0x368] sm:$0xff]
    %v172 = vld [vmem:[%s1 + $0x370] sm:$0xff]
    %v173 = vld [vmem:[%s1 + $0x378] sm:$0xff]
    %v174 = vld [vmem:[%s1 + $0x380] sm:$0xff]
    %v175 = vld [vmem:[%s1 + $0x388] sm:$0xff]
    %v176 = vld [vmem:[%s1 + $0x390] sm:$0xff]
    %v177 = vld [vmem:[%s1 + $0x398] sm:$0xff]
    %v178 = vld [vmem:[%s1 + $0x3a0] sm:$0xff]
    %v179 = vld [vmem:[%s1 + $0x3a8] sm:$0xff]
    %v180 = vld [vmem:[%s1 + $0x3b0] sm:$0xff]
    %v181 = vld [vmem:[%s1 + $0x3b8] sm:$0xff]
    %v182 = vld [vmem:[%s1 + $0x3c0] sm:$0xff]
    %v183 = vld [vmem:[%s1 + $0x3c8] sm:$0xff]
    %v184 = vld [vmem:[%s1 + $0x3d0] sm:$0xff]
    %v185 = vld [vmem:[%s1 + $0x3d8] sm:$0xff]
    %v186 = vld [vmem:[%s1 + $0x3e0] sm:$0xff]
    %v187 = vld [vmem:[%s1 + $0x3e8] sm:$0xff]
    %v188 = vld [vmem:[%s1 + $0x3f0] sm:$0xff]
    %v189 = vld [vmem:[%s1 + $0x3f8] sm:$0xff]
    %v190 = vld [vmem:[%s1 + $0x400] sm:$0xff]
    %v191 = vld [vmem:[%s1 + $0x408] sm:$0xff]
    %v192 = vld [vmem:[%s1 + $0x410] sm:$0xff]
    %v193 = vld [vmem:[%s1 + $0x418] sm:$0xff]
    %v194 = vld [vmem:[%s1 + $0x420] sm:$0xff]
    %v195 = vld [vmem:[%s1 + $0x428] sm:$0xff]
    %v196 = vld [vmem:[%s1 + $0x430] sm:$0xff]
    %v197 = vld [vmem:[%s1 + $0x438] sm:$0xff]
    %v198 = vld [vmem:[%s1 + $0x440] sm:$0xff]
    %v199 = vld [vmem:[%s1 + $0x448] sm:$0xff]
    %v200 = vld [vmem:[%s1 + $0x450] sm:$0xff]
    %v201 = vld [vmem:[%s1 + $0x458] sm:$0xff]
    %v202 = vld [vmem:[%s1 + $0x460] sm:$0xff]
    %v203 = vld [vmem:[%s1 + $0x468] sm:$0xff]
    %v204 = vld [vmem:[%s1 + $0x470] sm:$0xff]
    %v205 = vld [vmem:[%s1 + $0x478] sm:$0xff]
    %v206 = vld [vmem:[%s1 + $0x480] sm:$0xff]
    %v207 = vld [vmem:[%s1 + $0x488] sm:$0xff]
    %v208 = vld [vmem:[%s1 + $0x490] sm:$0xff]
    %v209 = vld [vmem:[%s1 + $0x498] sm:$0xff]
    %v210 = vld [vmem:[%s1 + $0x4a0] sm:$0xff]
    %v211 = vld [vmem:[%s1 + $0x4a8] sm:$0xff]
    %v212 = vld [vmem:[%s1 + $0x4b0] sm:$0xff]
    %v213 = vld [vmem:[%s1 + $0x4b8] sm:$0xff]
    %v214 = vld [vmem:[%s1 + $0x4c0] sm:$0xff]
    %v215 = vld [vmem:[%s1 + $0x4c8] sm:$0xff]
    %v216 = vld [vmem:[%s1 + $0x4d0] sm:$0xff]
    %v217 = vld [vmem:[%s1 + $0x4d8] sm:$0xff]
    %v218 = vld [vmem:[%s1 + $0x4e0] sm:$0xff]
    %v219 = vld [vmem:[%s1 + $0x4e8] sm:$0xff]
    %v220 = vld [vmem:[%s1 + $0x4f0] sm:$0xff]
    %v221 = vld [vmem:[%s1 + $0x4f8] sm:$0xff]
    %v222 = vld [vmem:[%s1 + $0x500] sm:$0xff]
    %v223 = vld [vmem:[%s1 + $0x508] sm:$0xff]
    %v224 = vld [vmem:[%s1 + $0x510] sm:$0xff]
    %v225 = vld [vmem:[%s1 + $0x518] sm:$0xff]
    %v226 = vld [vmem:[%s1 + $0x520] sm:$0xff]
    %v227 = vld [vmem:[%s1 + $0x528] sm:$0xff]
    %v228 = vld [vmem:[%s1 + $0x530] sm:$0xff]
    %v229 = vld [vmem:[%s1 + $0x538] sm:$0xff]
    %v230 = vld [vmem:[%s1 + $0x540] sm:$0xff]
    %v231 = vld [vmem:[%s1 + $0x548] sm:$0xff]
    %v232 = vld [vmem:[%s1 + $0x550] sm:$0xff]
    %v233 = vld [vmem:[%s1 + $0x558] sm:$0xff]
    %v234 = vld [vmem:[%s1 + $0x560] sm:$0xff]
    %v235 = vld [vmem:[%s1 + $0x568] sm:$0xff]
    %v236 = vld [vmem:[%s1 + $0x570] sm:$0xff]
    %v237 = vld [vmem:[%s1 + $0x578] sm:$0xff]
    %v238 = vld [vmem:[%s1 + $0x580] sm:$0xff]
    %v239 = vld [vmem:[%s1 + $0x588] sm:$0xff]
    %v240 = vld [vmem:[%s1 + $0x590] sm:$0xff]
    %v241 = vld [vmem:[%s1 + $0x598] sm:$0xff]
    %v242 = vld [vmem:[%s1 + $0x5a0] sm:$0xff]
    %v243 = vld [vmem:[%s1 + $0x5a8] sm:$0xff]
    %v244 = vld [vmem:[%s1 + $0x5b0] sm:$0xff]
    %v245 = vld [vmem:[%s1 + $0x5b8] sm:$0xff]
    %v246 = vld [vmem:[%s1 + $0x5c0] sm:$0xff]
    %v247 = vld [vmem:[%s1 + $0x5c8] sm:$0xff]
    %v248 = vld [vmem:[%s1 + $0x5d0] sm:$0xff]
    %v249 = vld [vmem:[%s1 + $0x5d8] sm:$0xff]
    %v250 = vld [vmem:[%s1 + $0x5e0] sm:$0xff]
    %v251 = vld [vmem:[%s1 + $0x5e8] sm:$0xff]
    %v252 = vld [vmem:[%s1 + $0x5f0] sm:$0xff]
    %v253 = vld [vmem:[%s1 + $0x5f8] sm:$0xff]
    %v254 = vld [vmem:[%s1 + $0x600] sm:$0xff]
    %v255 = vld [vmem:[%s1 + $0x608] sm:$0xff]
    %v256 = vld [vmem:[%s1 + $0x610] sm:$0xff]
    %v257 = vld [vmem:[%s1 + $0x618] sm:$0xff]
    %v258 = vld [vmem:[%s2] sm:$0xf]
    %v260 = vperm.slane %v258, 0
    %v261 = vperm.slane %v258, 1
    %v262 = vperm.slane %v258, 2
    %v263 = vperm.slane %v258, 3
    %v464 = vunpack.c.l.b16 %v62
    %v465 = vunpack.c.h.b16 %v62
    %v466 = vunpack.c.l.b16 %v63
    %v467 = vunpack.c.h.b16 %v63
    %v468 = vunpack.c.l.b16 %v64
    %v469 = vunpack.c.h.b16 %v64
    %v470 = vunpack.c.l.b16 %v65
    %v471 = vunpack.c.h.b16 %v65
    %v472 = vunpack.c.l.b16 %v66
    %v473 = vunpack.c.h.b16 %v66
    %v474 = vunpack.c.l.b16 %v67
    %v475 = vunpack.c.h.b16 %v67
    %v476 = vunpack.c.l.b16 %v68
    %v477 = vunpack.c.h.b16 %v68
    %v478 = vunpack.c.l.b16 %v69
    %v479 = vunpack.c.h.b16 %v69
    %v480 = vunpack.c.l.b16 %v70
    %v481 = vunpack.c.h.b16 %v70
    %v482 = vunpack.c.l.b16 %v71
    %v483 = vunpack.c.h.b16 %v71
    %v484 = vunpack.c.l.b16 %v72
    %v485 = vunpack.c.h.b16 %v72
    %v486 = vunpack.c.l.b16 %v73
    %v487 = vunpack.c.h.b16 %v73
    %v488 = vunpack.c.l.b16 %v74
    %v489 = vunpack.c.h.b16 %v74
    %v490 = vunpack.c.l.b16 %v75
    %v491 = vunpack.c.h.b16 %v75
    %v492 = vunpack.c.l.b16 %v76
    %v493 = vunpack.c.h.b16 %v76
    %v494 = vunpack.c.l.b16 %v77
    %v495 = vunpack.c.h.b16 %v77
    %v496 = vunpack.c.l.b16 %v78
    %v497 = vunpack.c.h.b16 %v78
    %v498 = vunpack.c.l.b16 %v79
    %v499 = vunpack.c.h.b16 %v79
    %v500 = vunpack.c.l.b16 %v80
    %v501 = vunpack.c.h.b16 %v80
    %v502 = vunpack.c.l.b16 %v81
    %v503 = vunpack.c.h.b16 %v81
    %v504 = vunpack.c.l.b16 %v82
    %v505 = vunpack.c.h.b16 %v82
    %v506 = vunpack.c.l.b16 %v83
    %v507 = vunpack.c.h.b16 %v83
    %v508 = vunpack.c.l.b16 %v84
    %v509 = vunpack.c.h.b16 %v84
    %v510 = vunpack.c.l.b16 %v85
    %v511 = vunpack.c.h.b16 %v85
    %v512 = vunpack.c.l.b16 %v86
    %v513 = vunpack.c.h.b16 %v86
    %v514 = vunpack.c.l.b16 %v87
    %v515 = vunpack.c.h.b16 %v87
    %v516 = vunpack.c.l.b16 %v88
    %v517 = vunpack.c.h.b16 %v88
    %v518 = vunpack.c.l.b16 %v89
    %v519 = vunpack.c.h.b16 %v89
    %v520 = vunpack.c.l.b16 %v90
    %v521 = vunpack.c.h.b16 %v90
    %v522 = vunpack.c.l.b16 %v91
    %v523 = vunpack.c.h.b16 %v91
    %v524 = vunpack.c.l.b16 %v92
    %v525 = vunpack.c.h.b16 %v92
    %v526 = vunpack.c.l.b16 %v93
    %v527 = vunpack.c.h.b16 %v93
    %v528 = vunpack.c.l.b16 %v94
    %v529 = vunpack.c.h.b16 %v94
    %v530 = vunpack.c.l.b16 %v95
    %v531 = vunpack.c.h.b16 %v95
    %v532 = vunpack.c.l.b16 %v96
    %v533 = vunpack.c.h.b16 %v96
    %v534 = vunpack.c.l.b16 %v97
    %v535 = vunpack.c.h.b16 %v97
    %v536 = vunpack.c.l.b16 %v98
    %v537 = vunpack.c.h.b16 %v98
    %v538 = vunpack.c.l.b16 %v99
    %v539 = vunpack.c.h.b16 %v99
    %v540 = vunpack.c.l.b16 %v100
    %v541 = vunpack.c.h.b16 %v100
    %v542 = vunpack.c.l.b16 %v101
    %v543 = vunpack.c.h.b16 %v101
    %v544 = vunpack.c.l.b16 %v102
    %v545 = vunpack.c.h.b16 %v102
    %v546 = vunpack.c.l.b16 %v103
    %v547 = vunpack.c.h.b16 %v103
    %v548 = vunpack.c.l.b16 %v104
    %v549 = vunpack.c.h.b16 %v104
    %v550 = vunpack.c.l.b16 %v105
    %v551 = vunpack.c.h.b16 %v105
    %v552 = vunpack.c.l.b16 %v106
    %v553 = vunpack.c.h.b16 %v106
    %v554 = vunpack.c.l.b16 %v107
    %v555 = vunpack.c.h.b16 %v107
    %v556 = vunpack.c.l.b16 %v108
    %v557 = vunpack.c.h.b16 %v108
    %v558 = vunpack.c.l.b16 %v109
    %v559 = vunpack.c.h.b16 %v109
    %v560 = vunpack.c.l.b16 %v110
    %v561 = vunpack.c.h.b16 %v110
    %v562 = vunpack.c.l.b16 %v111
    %v563 = vunpack.c.h.b16 %v111
    %v564 = vunpack.c.l.b16 %v112
    %v565 = vunpack.c.h.b16 %v112
    %v566 = vunpack.c.l.b16 %v113
    %v567 = vunpack.c.h.b16 %v113
    %v568 = vunpack.c.l.b16 %v114
    %v569 = vunpack.c.h.b16 %v114
    %v570 = vunpack.c.l.b16 %v115
    %v571 = vunpack.c.h.b16 %v115
    %v572 = vunpack.c.l.b16 %v116
    %v573 = vunpack.c.h.b16 %v116
    %v574 = vunpack.c.l.b16 %v117
    %v575 = vunpack.c.h.b16 %v117
    %v576 = vunpack.c.l.b16 %v118
    %v577 = vunpack.c.h.b16 %v118
    %v578 = vunpack.c.l.b16 %v119
    %v579 = vunpack.c.h.b16 %v119
    %v580 = vunpack.c.l.b16 %v120
    %v581 = vunpack.c.h.b16 %v120
    %v582 = vunpack.c.l.b16 %v121
    %v583 = vunpack.c.h.b16 %v121
    %v584 = vunpack.c.l.b16 %v122
    %v585 = vunpack.c.h.b16 %v122
    %v586 = vunpack.c.l.b16 %v123
    %v587 = vunpack.c.h.b16 %v123
    %v588 = vunpack.c.l.b16 %v124
    %v589 = vunpack.c.h.b16 %v124
    %v590 = vunpack.c.l.b16 %v125
    %v591 = vunpack.c.h.b16 %v125
    %v592 = vunpack.c.l.b16 %v126
    %v593 = vunpack.c.h.b16 %v126
    %v594 = vunpack.c.l.b16 %v127
    %v595 = vunpack.c.h.b16 %v127
    %v596 = vunpack.c.l.b16 %v128
    %v597 = vunpack.c.h.b16 %v128
    %v598 = vunpack.c.l.b16 %v129
    %v599 = vunpack.c.h.b16 %v129
    %v600 = vunpack.c.l.b16 %v130
    %v601 = vunpack.c.h.b16 %v130
    %v602 = vunpack.c.l.b16 %v131
    %v603 = vunpack.c.h.b16 %v131
    %v604 = vunpack.c.l.b16 %v132
    %v605 = vunpack.c.h.b16 %v132
    %v606 = vunpack.c.l.b16 %v133
    %v607 = vunpack.c.h.b16 %v133
    %v608 = vunpack.c.l.b16 %v134
    %v609 = vunpack.c.h.b16 %v134
    %v610 = vunpack.c.l.b16 %v135
    %v611 = vunpack.c.h.b16 %v135
    %v612 = vunpack.c.l.b16 %v136
    %v613 = vunpack.c.h.b16 %v136
    %v614 = vunpack.c.l.b16 %v137
    %v615 = vunpack.c.h.b16 %v137
    %v616 = vunpack.c.l.b16 %v138
    %v617 = vunpack.c.h.b16 %v138
    %v618 = vunpack.c.l.b16 %v139
    %v619 = vunpack.c.h.b16 %v139
    %v620 = vunpack.c.l.b16 %v140
    %v621 = vunpack.c.h.b16 %v140
    %v622 = vunpack.c.l.b16 %v141
    %v623 = vunpack.c.h.b16 %v141
    %v624 = vunpack.c.l.b16 %v142
    %v625 = vunpack.c.h.b16 %v142
    %v626 = vunpack.c.l.b16 %v143
    %v627 = vunpack.c.h.b16 %v143
    %v628 = vunpack.c.l.b16 %v144
    %v629 = vunpack.c.h.b16 %v144
    %v630 = vunpack.c.l.b16 %v145
    %v631 = vunpack.c.h.b16 %v145
    %v632 = vunpack.c.l.b16 %v146
    %v633 = vunpack.c.h.b16 %v146
    %v634 = vunpack.c.l.b16 %v147
    %v635 = vunpack.c.h.b16 %v147
    %v636 = vunpack.c.l.b16 %v148
    %v637 = vunpack.c.h.b16 %v148
    %v638 = vunpack.c.l.b16 %v149
    %v639 = vunpack.c.h.b16 %v149
    %v640 = vunpack.c.l.b16 %v150
    %v641 = vunpack.c.h.b16 %v150
    %v642 = vunpack.c.l.b16 %v151
    %v643 = vunpack.c.h.b16 %v151
    %v644 = vunpack.c.l.b16 %v152
    %v645 = vunpack.c.h.b16 %v152
    %v646 = vunpack.c.l.b16 %v153
    %v647 = vunpack.c.h.b16 %v153
    %v648 = vunpack.c.l.b16 %v154
    %v649 = vunpack.c.h.b16 %v154
    %v650 = vunpack.c.l.b16 %v155
    %v651 = vunpack.c.h.b16 %v155
    %v652 = vunpack.c.l.b16 %v156
    %v653 = vunpack.c.h.b16 %v156
    %v654 = vunpack.c.l.b16 %v157
    %v655 = vunpack.c.h.b16 %v157
    %v656 = vunpack.c.l.b16 %v158
    %v657 = vunpack.c.h.b16 %v158
    %v658 = vunpack.c.l.b16 %v159
    %v659 = vunpack.c.h.b16 %v159
    %v660 = vunpack.c.l.b16 %v160
    %v661 = vunpack.c.h.b16 %v160
    %v662 = vunpack.c.l.b16 %v161
    %v663 = vunpack.c.h.b16 %v161
    %v664 = vunpack.c.l.b16 %v162
    %v665 = vunpack.c.h.b16 %v162
    %v666 = vunpack.c.l.b16 %v163
    %v667 = vunpack.c.h.b16 %v163
    %v668 = vunpack.c.l.b16 %v164
    %v669 = vunpack.c.h.b16 %v164
    %v670 = vunpack.c.l.b16 %v165
    %v671 = vunpack.c.h.b16 %v165
    %v672 = vunpack.c.l.b16 %v166
    %v673 = vunpack.c.h.b16 %v166
    %v674 = vunpack.c.l.b16 %v167
    %v675 = vunpack.c.h.b16 %v167
    %v676 = vunpack.c.l.b16 %v168
    %v677 = vunpack.c.h.b16 %v168
    %v678 = vunpack.c.l.b16 %v169
    %v679 = vunpack.c.h.b16 %v169
    %v680 = vunpack.c.l.b16 %v170
    %v681 = vunpack.c.h.b16 %v170
    %v682 = vunpack.c.l.b16 %v171
    %v683 = vunpack.c.h.b16 %v171
    %v684 = vunpack.c.l.b16 %v172
    %v685 = vunpack.c.h.b16 %v172
    %v686 = vunpack.c.l.b16 %v173
    %v687 = vunpack.c.h.b16 %v173
    %v688 = vunpack.c.l.b16 %v174
    %v689 = vunpack.c.h.b16 %v174
    %v690 = vunpack.c.l.b16 %v175
    %v691 = vunpack.c.h.b16 %v175
    %v692 = vunpack.c.l.b16 %v176
    %v693 = vunpack.c.h.b16 %v176
    %v694 = vunpack.c.l.b16 %v177
    %v695 = vunpack.c.h.b16 %v177
    %v696 = vunpack.c.l.b16 %v178
    %v697 = vunpack.c.h.b16 %v178
    %v698 = vunpack.c.l.b16 %v179
    %v699 = vunpack.c.h.b16 %v179
    %v700 = vunpack.c.l.b16 %v180
    %v701 = vunpack.c.h.b16 %v180
    %v702 = vunpack.c.l.b16 %v181
    %v703 = vunpack.c.h.b16 %v181
    %v704 = vunpack.c.l.b16 %v182
    %v705 = vunpack.c.h.b16 %v182
    %v706 = vunpack.c.l.b16 %v183
    %v707 = vunpack.c.h.b16 %v183
    %v708 = vunpack.c.l.b16 %v184
    %v709 = vunpack.c.h.b16 %v184
    %v710 = vunpack.c.l.b16 %v185
    %v711 = vunpack.c.h.b16 %v185
    %v712 = vunpack.c.l.b16 %v186
    %v713 = vunpack.c.h.b16 %v186
    %v714 = vunpack.c.l.b16 %v187
    %v715 = vunpack.c.h.b16 %v187
    %v716 = vunpack.c.l.b16 %v188
    %v717 = vunpack.c.h.b16 %v188
    %v718 = vunpack.c.l.b16 %v189
    %v719 = vunpack.c.h.b16 %v189
    %v720 = vunpack.c.l.b16 %v190
    %v721 = vunpack.c.h.b16 %v190
    %v722 = vunpack.c.l.b16 %v191
    %v723 = vunpack.c.h.b16 %v191
    %v724 = vunpack.c.l.b16 %v192
    %v725 = vunpack.c.h.b16 %v192
    %v726 = vunpack.c.l.b16 %v193
    %v727 = vunpack.c.h.b16 %v193
    %v728 = vunpack.c.l.b16 %v194
    %v729 = vunpack.c.h.b16 %v194
    %v730 = vunpack.c.l.b16 %v195
    %v731 = vunpack.c.h.b16 %v195
    %v732 = vunpack.c.l.b16 %v196
    %v733 = vunpack.c.h.b16 %v196
    %v734 = vunpack.c.l.b16 %v197
    %v735 = vunpack.c.h.b16 %v197
    %v736 = vunpack.c.l.b16 %v198
    %v737 = vunpack.c.h.b16 %v198
    %v738 = vunpack.c.l.b16 %v199
    %v739 = vunpack.c.h.b16 %v199
    %v740 = vunpack.c.l.b16 %v200
    %v741 = vunpack.c.h.b16 %v200
    %v742 = vunpack.c.l.b16 %v201
    %v743 = vunpack.c.h.b16 %v201
    %v744 = vunpack.c.l.b16 %v202
    %v745 = vunpack.c.h.b16 %v202
    %v746 = vunpack.c.l.b16 %v203
    %v747 = vunpack.c.h.b16 %v203
    %v748 = vunpack.c.l.b16 %v204
    %v749 = vunpack.c.h.b16 %v204
    %v750 = vunpack.c.l.b16 %v205
    %v751 = vunpack.c.h.b16 %v205
    %v752 = vunpack.c.l.b16 %v206
    %v753 = vunpack.c.h.b16 %v206
    %v754 = vunpack.c.l.b16 %v207
    %v755 = vunpack.c.h.b16 %v207
    %v756 = vunpack.c.l.b16 %v208
    %v757 = vunpack.c.h.b16 %v208
    %v758 = vunpack.c.l.b16 %v209
    %v759 = vunpack.c.h.b16 %v209
    %v760 = vunpack.c.l.b16 %v210
    %v761 = vunpack.c.h.b16 %v210
    %v762 = vunpack.c.l.b16 %v211
    %v763 = vunpack.c.h.b16 %v211
    %v764 = vunpack.c.l.b16 %v212
    %v765 = vunpack.c.h.b16 %v212
    %v766 = vunpack.c.l.b16 %v213
    %v767 = vunpack.c.h.b16 %v213
    %v768 = vunpack.c.l.b16 %v214
    %v769 = vunpack.c.h.b16 %v214
    %v770 = vunpack.c.l.b16 %v215
    %v771 = vunpack.c.h.b16 %v215
    %v772 = vunpack.c.l.b16 %v216
    %v773 = vunpack.c.h.b16 %v216
    %v774 = vunpack.c.l.b16 %v217
    %v775 = vunpack.c.h.b16 %v217
    %v776 = vunpack.c.l.b16 %v218
    %v777 = vunpack.c.h.b16 %v218
    %v778 = vunpack.c.l.b16 %v219
    %v779 = vunpack.c.h.b16 %v219
    %v780 = vunpack.c.l.b16 %v220
    %v781 = vunpack.c.h.b16 %v220
    %v782 = vunpack.c.l.b16 %v221
    %v783 = vunpack.c.h.b16 %v221
    %v784 = vunpack.c.l.b16 %v222
    %v785 = vunpack.c.h.b16 %v222
    %v786 = vunpack.c.l.b16 %v223
    %v787 = vunpack.c.h.b16 %v223
    %v788 = vunpack.c.l.b16 %v224
    %v789 = vunpack.c.h.b16 %v224
    %v790 = vunpack.c.l.b16 %v225
    %v791 = vunpack.c.h.b16 %v225
    %v792 = vunpack.c.l.b16 %v226
    %v793 = vunpack.c.h.b16 %v226
    %v794 = vunpack.c.l.b16 %v227
    %v795 = vunpack.c.h.b16 %v227
    %v796 = vunpack.c.l.b16 %v228
    %v797 = vunpack.c.h.b16 %v228
    %v798 = vunpack.c.l.b16 %v229
    %v799 = vunpack.c.h.b16 %v229
    %v800 = vunpack.c.l.b16 %v230
    %v801 = vunpack.c.h.b16 %v230
    %v802 = vunpack.c.l.b16 %v231
    %v803 = vunpack.c.h.b16 %v231
    %v804 = vunpack.c.l.b16 %v232
    %v805 = vunpack.c.h.b16 %v232
    %v806 = vunpack.c.l.b16 %v233
    %v807 = vunpack.c.h.b16 %v233
    %v808 = vunpack.c.l.b16 %v234
    %v809 = vunpack.c.h.b16 %v234
    %v810 = vunpack.c.l.b16 %v235
    %v811 = vunpack.c.h.b16 %v235
    %v812 = vunpack.c.l.b16 %v236
    %v813 = vunpack.c.h.b16 %v236
    %v814 = vunpack.c.l.b16 %v237
    %v815 = vunpack.c.h.b16 %v237
    %v816 = vunpack.c.l.b16 %v238
    %v817 = vunpack.c.h.b16 %v238
    %v818 = vunpack.c.l.b16 %v239
    %v819 = vunpack.c.h.b16 %v239
    %v820 = vunpack.c.l.b16 %v240
    %v821 = vunpack.c.h.b16 %v240
    %v822 = vunpack.c.l.b16 %v241
    %v823 = vunpack.c.h.b16 %v241
    %v824 = vunpack.c.l.b16 %v242
    %v825 = vunpack.c.h.b16 %v242
    %v826 = vunpack.c.l.b16 %v243
    %v827 = vunpack.c.h.b16 %v243
    %v828 = vunpack.c.l.b16 %v244
    %v829 = vunpack.c.h.b16 %v244
    %v830 = vunpack.c.l.b16 %v245
    %v831 = vunpack.c.h.b16 %v245
    %v832 = vunpack.c.l.b16 %v246
    %v833 = vunpack.c.h.b16 %v246
    %v834 = vunpack.c.l.b16 %v247
    %v835 = vunpack.c.h.b16 %v247
    %v836 = vunpack.c.l.b16 %v248
    %v837 = vunpack.c.h.b16 %v248
    %v838 = vunpack.c.l.b16 %v249
    %v839 = vunpack.c.h.b16 %v249
    %v840 = vunpack.c.l.b16 %v250
    %v841 = vunpack.c.h.b16 %v250
    %v842 = vunpack.c.l.b16 %v251
    %v843 = vunpack.c.h.b16 %v251
    %v844 = vunpack.c.l.b16 %v252
    %v845 = vunpack.c.h.b16 %v252
    %v846 = vunpack.c.l.b16 %v253
    %v847 = vunpack.c.h.b16 %v253
    %v848 = vunpack.c.l.b16 %v254
    %v849 = vunpack.c.h.b16 %v254
    %v850 = vunpack.c.l.b16 %v255
    %v851 = vunpack.c.h.b16 %v255
    %v852 = vunpack.c.l.b16 %v256
    %v853 = vunpack.c.h.b16 %v256
    %v854 = vunpack.c.l.b16 %v257
    %v855 = vunpack.c.h.b16 %v257
    %v856 = vpack.c.b16 %v468, %v464
    %v857 = vpack.c.b16 %v469, %v465
    %v858 = vpack.c.b16 %v470, %v466
    %v859 = vpack.c.b16 %v471, %v467
    %v860 = vpack.c.b16 %v476, %v472
    %v861 = vpack.c.b16 %v477, %v473
    %v862 = vpack.c.b16 %v478, %v474
    %v863 = vpack.c.b16 %v479, %v475
    %v864 = vpack.c.b16 %v484, %v480
    %v865 = vpack.c.b16 %v485, %v481
    %v866 = vpack.c.b16 %v486, %v482
    %v867 = vpack.c.b16 %v487, %v483
    %v868 = vpack.c.b16 %v492, %v488
    %v869 = vpack.c.b16 %v493, %v489
    %v870 = vpack.c.b16 %v494, %v490
    %v871 = vpack.c.b16 %v495, %v491
    %v872 = vpack.c.b16 %v500, %v496
    %v873 = vpack.c.b16 %v501, %v497
    %v874 = vpack.c.b16 %v502, %v498
    %v875 = vpack.c.b16 %v503, %v499
    %v876 = vpack.c.b16 %v508, %v504
    %v877 = vpack.c.b16 %v509, %v505
    %v878 = vpack.c.b16 %v510, %v506
    %v879 = vpack.c.b16 %v511, %v507
    %v880 = vpack.c.b16 %v516, %v512
    %v881 = vpack.c.b16 %v517, %v513
    %v882 = vpack.c.b16 %v518, %v514
    %v883 = vpack.c.b16 %v519, %v515
    %v884 = vpack.c.b16 %v524, %v520
    %v885 = vpack.c.b16 %v525, %v521
    %v886 = vpack.c.b16 %v526, %v522
    %v887 = vpack.c.b16 %v527, %v523
    %v888 = vpack.c.b16 %v532, %v528
    %v889 = vpack.c.b16 %v533, %v529
    %v890 = vpack.c.b16 %v534, %v530
    %v891 = vpack.c.b16 %v535, %v531
    %v892 = vpack.c.b16 %v540, %v536
    %v893 = vpack.c.b16 %v541, %v537
    %v894 = vpack.c.b16 %v542, %v538
    %v895 = vpack.c.b16 %v543, %v539
    %v896 = vpack.c.b16 %v548, %v544
    %v897 = vpack.c.b16 %v549, %v545
    %v898 = vpack.c.b16 %v550, %v546
    %v899 = vpack.c.b16 %v551, %v547
    %v900 = vpack.c.b16 %v556, %v552
    %v901 = vpack.c.b16 %v557, %v553
    %v902 = vpack.c.b16 %v558, %v554
    %v903 = vpack.c.b16 %v559, %v555
    %v904 = vpack.c.b16 %v564, %v560
    %v905 = vpack.c.b16 %v565, %v561
    %v906 = vpack.c.b16 %v566, %v562
    %v907 = vpack.c.b16 %v567, %v563
    %v908 = vpack.c.b16 %v572, %v568
    %v909 = vpack.c.b16 %v573, %v569
    %v910 = vpack.c.b16 %v574, %v570
    %v911 = vpack.c.b16 %v575, %v571
    %v912 = vpack.c.b16 %v580, %v576
    %v913 = vpack.c.b16 %v581, %v577
    %v914 = vpack.c.b16 %v582, %v578
    %v915 = vpack.c.b16 %v583, %v579
    %v916 = vpack.c.b16 %v588, %v584
    %v917 = vpack.c.b16 %v589, %v585
    %v918 = vpack.c.b16 %v590, %v586
    %v919 = vpack.c.b16 %v591, %v587
    %v920 = vpack.c.b16 %v596, %v592
    %v921 = vpack.c.b16 %v597, %v593
    %v922 = vpack.c.b16 %v598, %v594
    %v923 = vpack.c.b16 %v599, %v595
    %v924 = vpack.c.b16 %v604, %v600
    %v925 = vpack.c.b16 %v605, %v601
    %v926 = vpack.c.b16 %v606, %v602
    %v927 = vpack.c.b16 %v607, %v603
    %v928 = vpack.c.b16 %v612, %v608
    %v929 = vpack.c.b16 %v613, %v609
    %v930 = vpack.c.b16 %v614, %v610
    %v931 = vpack.c.b16 %v615, %v611
    %v932 = vpack.c.b16 %v620, %v616
    %v933 = vpack.c.b16 %v621, %v617
    %v934 = vpack.c.b16 %v622, %v618
    %v935 = vpack.c.b16 %v623, %v619
    %v936 = vpack.c.b16 %v628, %v624
    %v937 = vpack.c.b16 %v629, %v625
    %v938 = vpack.c.b16 %v630, %v626
    %v939 = vpack.c.b16 %v631, %v627
    %v940 = vpack.c.b16 %v636, %v632
    %v941 = vpack.c.b16 %v637, %v633
    %v942 = vpack.c.b16 %v638, %v634
    %v943 = vpack.c.b16 %v639, %v635
    %v944 = vpack.c.b16 %v644, %v640
    %v945 = vpack.c.b16 %v645, %v641
    %v946 = vpack.c.b16 %v646, %v642
    %v947 = vpack.c.b16 %v647, %v643
    %v948 = vpack.c.b16 %v652, %v648
    %v949 = vpack.c.b16 %v653, %v649
    %v950 = vpack.c.b16 %v654, %v650
    %v951 = vpack.c.b16 %v655, %v651
    %v952 = vpack.c.b16 %v660, %v656
    %v953 = vpack.c.b16 %v661, %v657
    %v954 = vpack.c.b16 %v662, %v658
    %v955 = vpack.c.b16 %v663, %v659
    %v956 = vpack.c.b16 %v668, %v664
    %v957 = vpack.c.b16 %v669, %v665
    %v958 = vpack.c.b16 %v670, %v666
    %v959 = vpack.c.b16 %v671, %v667
    %v960 = vpack.c.b16 %v676, %v672
    %v961 = vpack.c.b16 %v677, %v673
    %v962 = vpack.c.b16 %v678, %v674
    %v963 = vpack.c.b16 %v679, %v675
    %v964 = vpack.c.b16 %v684, %v680
    %v965 = vpack.c.b16 %v685, %v681
    %v966 = vpack.c.b16 %v686, %v682
    %v967 = vpack.c.b16 %v687, %v683
    %v968 = vpack.c.b16 %v692, %v688
    %v969 = vpack.c.b16 %v693, %v689
    %v970 = vpack.c.b16 %v694, %v690
    %v971 = vpack.c.b16 %v695, %v691
    %v972 = vpack.c.b16 %v700, %v696
    %v973 = vpack.c.b16 %v701, %v697
    %v974 = vpack.c.b16 %v702, %v698
    %v975 = vpack.c.b16 %v703, %v699
    %v976 = vpack.c.b16 %v708, %v704
    %v977 = vpack.c.b16 %v709, %v705
    %v978 = vpack.c.b16 %v710, %v706
    %v979 = vpack.c.b16 %v711, %v707
    %v980 = vpack.c.b16 %v716, %v712
    %v981 = vpack.c.b16 %v717, %v713
    %v982 = vpack.c.b16 %v718, %v714
    %v983 = vpack.c.b16 %v719, %v715
    %v984 = vpack.c.b16 %v724, %v720
    %v985 = vpack.c.b16 %v725, %v721
    %v986 = vpack.c.b16 %v726, %v722
    %v987 = vpack.c.b16 %v727, %v723
    %v988 = vpack.c.b16 %v732, %v728
    %v989 = vpack.c.b16 %v733, %v729
    %v990 = vpack.c.b16 %v734, %v730
    %v991 = vpack.c.b16 %v735, %v731
    %v992 = vpack.c.b16 %v740, %v736
    %v993 = vpack.c.b16 %v741, %v737
    %v994 = vpack.c.b16 %v742, %v738
    %v995 = vpack.c.b16 %v743, %v739
    %v996 = vpack.c.b16 %v748, %v744
    %v997 = vpack.c.b16 %v749, %v745
    %v998 = vpack.c.b16 %v750, %v746
    %v999 = vpack.c.b16 %v751, %v747
    %v1000 = vpack.c.b16 %v756, %v752
    %v1001 = vpack.c.b16 %v757, %v753
    %v1002 = vpack.c.b16 %v758, %v754
    %v1003 = vpack.c.b16 %v759, %v755
    %v1004 = vpack.c.b16 %v764, %v760
    %v1005 = vpack.c.b16 %v765, %v761
    %v1006 = vpack.c.b16 %v766, %v762
    %v1007 = vpack.c.b16 %v767, %v763
    %v1008 = vpack.c.b16 %v772, %v768
    %v1009 = vpack.c.b16 %v773, %v769
    %v1010 = vpack.c.b16 %v774, %v770
    %v1011 = vpack.c.b16 %v775, %v771
    %v1012 = vpack.c.b16 %v780, %v776
    %v1013 = vpack.c.b16 %v781, %v777
    %v1014 = vpack.c.b16 %v782, %v778
    %v1015 = vpack.c.b16 %v783, %v779
    %v1016 = vpack.c.b16 %v788, %v784
    %v1017 = vpack.c.b16 %v789, %v785
    %v1018 = vpack.c.b16 %v790, %v786
    %v1019 = vpack.c.b16 %v791, %v787
    %v1020 = vpack.c.b16 %v796, %v792
    %v1021 = vpack.c.b16 %v797, %v793
    %v1022 = vpack.c.b16 %v798, %v794
    %v1023 = vpack.c.b16 %v799, %v795
    %v1024 = vpack.c.b16 %v804, %v800
    %v1025 = vpack.c.b16 %v805, %v801
    %v1026 = vpack.c.b16 %v806, %v802
    %v1027 = vpack.c.b16 %v807, %v803
    %v1028 = vpack.c.b16 %v812, %v808
    %v1029 = vpack.c.b16 %v813, %v809
    %v1030 = vpack.c.b16 %v814, %v810
    %v1031 = vpack.c.b16 %v815, %v811
    %v1032 = vpack.c.b16 %v820, %v816
    %v1033 = vpack.c.b16 %v821, %v817
    %v1034 = vpack.c.b16 %v822, %v818
    %v1035 = vpack.c.b16 %v823, %v819
    %v1036 = vpack.c.b16 %v828, %v824
    %v1037 = vpack.c.b16 %v829, %v825
    %v1038 = vpack.c.b16 %v830, %v826
    %v1039 = vpack.c.b16 %v831, %v827
    %v1040 = vpack.c.b16 %v836, %v832
    %v1041 = vpack.c.b16 %v837, %v833
    %v1042 = vpack.c.b16 %v838, %v834
    %v1043 = vpack.c.b16 %v839, %v835
    %v1044 = vpack.c.b16 %v844, %v840
    %v1045 = vpack.c.b16 %v845, %v841
    %v1046 = vpack.c.b16 %v846, %v842
    %v1047 = vpack.c.b16 %v847, %v843
    %v1048 = vpack.c.b16 %v852, %v848
    %v1049 = vpack.c.b16 %v853, %v849
    %v1050 = vpack.c.b16 %v854, %v850
    %v1051 = vpack.c.b16 %v855, %v851
    %vm1248 = vcmask 130048
    %v1250 = vsel %vm1248, %v61, 0
    %1252 = vmatpush.bf16.msra.mxu0 %v884
    %1253 = vmatpush.bf16.msra.mxu0 %v880
    %1254 = vmatpush.bf16.msra.mxu0 %v876
    %1255 = vmatpush.bf16.msra.mxu0 %v872
    %1256 = vmatpush.bf16.msra.mxu0 %v868
    %1257 = vmatpush.bf16.msra.mxu0 %v864
    %1258 = vmatpush.bf16.msra.mxu0 %v860
    %1259 = vmatpush.bf16.msra.mxu0 %v856
    %1260 = vmatmul.bf16.gmra.mxu0 %v55
    %v1261 = vpop.f32.mrf.mxu0
    %v1262 = vadd.f32 %v260, %v1261
    %v1263 = vpop.f32.mrf.mxu0
    %1264 = vdwg.mxu0
    %1265 = vmatpush.bf16.msra.mxu0 %v916
    %1266 = vmatpush.bf16.msra.mxu0 %v912
    %1267 = vmatpush.bf16.msra.mxu0 %v908
    %1268 = vmatpush.bf16.msra.mxu0 %v904
    %1269 = vmatpush.bf16.msra.mxu0 %v900
    %1270 = vmatpush.bf16.msra.mxu0 %v896
    %1271 = vmatpush.bf16.msra.mxu0 %v892
    %1272 = vmatpush.bf16.msra.mxu0 %v888
    %1273 = vmatmul.bf16.gmra.mxu0 %v56
    %v1274 = vpop.f32.mrf.mxu0
    %v1275 = vadd.f32 %v1262, %v1274
    %v1276 = vpop.f32.mrf.mxu0
    %1277 = vdwg.mxu0
    %1278 = vmatpush.bf16.msra.mxu0 %v948
    %1279 = vmatpush.bf16.msra.mxu0 %v944
    %1280 = vmatpush.bf16.msra.mxu0 %v940
    %1281 = vmatpush.bf16.msra.mxu0 %v936
    %1282 = vmatpush.bf16.msra.mxu0 %v932
    %1283 = vmatpush.bf16.msra.mxu0 %v928
    %1284 = vmatpush.bf16.msra.mxu0 %v924
    %1285 = vmatpush.bf16.msra.mxu0 %v920
    %1286 = vmatmul.bf16.gmra.mxu0 %v57
    %v1287 = vpop.f32.mrf.mxu0
    %v1288 = vadd.f32 %v1275, %v1287
    %v1289 = vpop.f32.mrf.mxu0
    %1290 = vdwg.mxu0
    %1291 = vmatpush.bf16.msra.mxu0 %v980
    %1292 = vmatpush.bf16.msra.mxu0 %v976
    %1293 = vmatpush.bf16.msra.mxu0 %v972
    %1294 = vmatpush.bf16.msra.mxu0 %v968
    %1295 = vmatpush.bf16.msra.mxu0 %v964
    %1296 = vmatpush.bf16.msra.mxu0 %v960
    %1297 = vmatpush.bf16.msra.mxu0 %v956
    %1298 = vmatpush.bf16.msra.mxu0 %v952
    %1299 = vmatmul.bf16.gmra.mxu0 %v58
    %v1300 = vpop.f32.mrf.mxu0
    %v1301 = vadd.f32 %v1288, %v1300
    %v1302 = vpop.f32.mrf.mxu0
    %1303 = vdwg.mxu0
    %1304 = vmatpush.bf16.msra.mxu0 %v1012
    %1305 = vmatpush.bf16.msra.mxu0 %v1008
    %1306 = vmatpush.bf16.msra.mxu0 %v1004
    %1307 = vmatpush.bf16.msra.mxu0 %v1000
    %1308 = vmatpush.bf16.msra.mxu0 %v996
    %1309 = vmatpush.bf16.msra.mxu0 %v992
    %1310 = vmatpush.bf16.msra.mxu0 %v988
    %1311 = vmatpush.bf16.msra.mxu0 %v984
    %1312 = vmatmul.bf16.gmra.mxu0 %v59
    %v1313 = vpop.f32.mrf.mxu0
    %v1314 = vadd.f32 %v1301, %v1313
    %v1315 = vpop.f32.mrf.mxu0
    %1316 = vdwg.mxu0
    %1317 = vmatpush.bf16.msra.mxu0 %v1044
    %1318 = vmatpush.bf16.msra.mxu0 %v1040
    %1319 = vmatpush.bf16.msra.mxu0 %v1036
    %1320 = vmatpush.bf16.msra.mxu0 %v1032
    %1321 = vmatpush.bf16.msra.mxu0 %v1028
    %1322 = vmatpush.bf16.msra.mxu0 %v1024
    %1323 = vmatpush.bf16.msra.mxu0 %v1020
    %1324 = vmatpush.bf16.msra.mxu0 %v1016
    %1325 = vmatmul.bf16.gmra.mxu0 %v60
    %v1326 = vpop.f32.mrf.mxu0
    %v1327 = vadd.f32 %v1314, %v1326
    %v1328 = vpop.f32.mrf.mxu0
    %1329 = vdwg.mxu0
    %1330 = vmatpush.bf16.msra.mxu0 0
    %1331 = vmatpush.bf16.msra.mxu0 0
    %1332 = vmatpush.bf16.msra.mxu0 0
    %1333 = vmatpush.bf16.msra.mxu0 0
    %1334 = vmatpush.bf16.msra.mxu0 0
    %1335 = vmatpush.bf16.msra.mxu0 0
    %1336 = vmatpush.bf16.msra.mxu0 0
    %1337 = vmatpush.bf16.msra.mxu0 %v1048
    %1338 = vmatmul.bf16.gmra.mxu0 %v1250
    %v1339 = vpop.f32.mrf.mxu0
    %v1340 = vadd.f32 %v1327, %v1339
    %v1341 = vpop.f32.mrf.mxu0
    %1342 = vdwg.mxu0
    %1343 = vmatpush.bf16.msra.mxu0 %v885
    %1344 = vmatpush.bf16.msra.mxu0 %v881
    %1345 = vmatpush.bf16.msra.mxu0 %v877
    %1346 = vmatpush.bf16.msra.mxu0 %v873
    %1347 = vmatpush.bf16.msra.mxu0 %v869
    %1348 = vmatpush.bf16.msra.mxu0 %v865
    %1349 = vmatpush.bf16.msra.mxu0 %v861
    %1350 = vmatpush.bf16.msra.mxu0 %v857
    %1351 = vmatmul.bf16.gmra.mxu0 %v55
    %v1352 = vpop.f32.mrf.mxu0
    %v1353 = vadd.f32 %v261, %v1352
    %v1354 = vpop.f32.mrf.mxu0
    %1355 = vdwg.mxu0
    %1356 = vmatpush.bf16.msra.mxu0 %v917
    %1357 = vmatpush.bf16.msra.mxu0 %v913
    %1358 = vmatpush.bf16.msra.mxu0 %v909
    %1359 = vmatpush.bf16.msra.mxu0 %v905
    %1360 = vmatpush.bf16.msra.mxu0 %v901
    %1361 = vmatpush.bf16.msra.mxu0 %v897
    %1362 = vmatpush.bf16.msra.mxu0 %v893
    %1363 = vmatpush.bf16.msra.mxu0 %v889
    %1364 = vmatmul.bf16.gmra.mxu0 %v56
    %v1365 = vpop.f32.mrf.mxu0
    %v1366 = vadd.f32 %v1353, %v1365
    %v1367 = vpop.f32.mrf.mxu0
    %1368 = vdwg.mxu0
    %1369 = vmatpush.bf16.msra.mxu0 %v949
    %1370 = vmatpush.bf16.msra.mxu0 %v945
    %1371 = vmatpush.bf16.msra.mxu0 %v941
    %1372 = vmatpush.bf16.msra.mxu0 %v937
    %1373 = vmatpush.bf16.msra.mxu0 %v933
    %1374 = vmatpush.bf16.msra.mxu0 %v929
    %1375 = vmatpush.bf16.msra.mxu0 %v925
    %1376 = vmatpush.bf16.msra.mxu0 %v921
    %1377 = vmatmul.bf16.gmra.mxu0 %v57
    %v1378 = vpop.f32.mrf.mxu0
    %v1379 = vadd.f32 %v1366, %v1378
    %v1380 = vpop.f32.mrf.mxu0
    %1381 = vdwg.mxu0
    %1382 = vmatpush.bf16.msra.mxu0 %v981
    %1383 = vmatpush.bf16.msra.mxu0 %v977
    %1384 = vmatpush.bf16.msra.mxu0 %v973
    %1385 = vmatpush.bf16.msra.mxu0 %v969
    %1386 = vmatpush.bf16.msra.mxu0 %v965
    %1387 = vmatpush.bf16.msra.mxu0 %v961
    %1388 = vmatpush.bf16.msra.mxu0 %v957
    %1389 = vmatpush.bf16.msra.mxu0 %v953
    %1390 = vmatmul.bf16.gmra.mxu0 %v58
    %v1391 = vpop.f32.mrf.mxu0
    %v1392 = vadd.f32 %v1379, %v1391
    %v1393 = vpop.f32.mrf.mxu0
    %1394 = vdwg.mxu0
    %1395 = vmatpush.bf16.msra.mxu0 %v1013
    %1396 = vmatpush.bf16.msra.mxu0 %v1009
    %1397 = vmatpush.bf16.msra.mxu0 %v1005
    %1398 = vmatpush.bf16.msra.mxu0 %v1001
    %1399 = vmatpush.bf16.msra.mxu0 %v997
    %1400 = vmatpush.bf16.msra.mxu0 %v993
    %1401 = vmatpush.bf16.msra.mxu0 %v989
    %1402 = vmatpush.bf16.msra.mxu0 %v985
    %1403 = vmatmul.bf16.gmra.mxu0 %v59
    %v1404 = vpop.f32.mrf.mxu0
    %v1405 = vadd.f32 %v1392, %v1404
    %v1406 = vpop.f32.mrf.mxu0
    %1407 = vdwg.mxu0
    %1408 = vmatpush.bf16.msra.mxu0 %v1045
    %1409 = vmatpush.bf16.msra.mxu0 %v1041
    %1410 = vmatpush.bf16.msra.mxu0 %v1037
    %1411 = vmatpush.bf16.msra.mxu0 %v1033
    %1412 = vmatpush.bf16.msra.mxu0 %v1029
    %1413 = vmatpush.bf16.msra.mxu0 %v1025
    %1414 = vmatpush.bf16.msra.mxu0 %v1021
    %1415 = vmatpush.bf16.msra.mxu0 %v1017
    %1416 = vmatmul.bf16.gmra.mxu0 %v60
    %v1417 = vpop.f32.mrf.mxu0
    %v1418 = vadd.f32 %v1405, %v1417
    %v1419 = vpop.f32.mrf.mxu0
    %1420 = vdwg.mxu0
    %1421 = vmatpush.bf16.msra.mxu0 0
    %1422 = vmatpush.bf16.msra.mxu0 0
    %1423 = vmatpush.bf16.msra.mxu0 0
    %1424 = vmatpush.bf16.msra.mxu0 0
    %1425 = vmatpush.bf16.msra.mxu0 0
    %1426 = vmatpush.bf16.msra.mxu0 0
    %1427 = vmatpush.bf16.msra.mxu0 0
    %1428 = vmatpush.bf16.msra.mxu0 %v1049
    %1429 = vmatmul.bf16.gmra.mxu0 %v1250
    %v1430 = vpop.f32.mrf.mxu0
    %v1431 = vadd.f32 %v1418, %v1430
    %v1432 = vpop.f32.mrf.mxu0
    %1433 = vdwg.mxu0
    %1434 = vmatpush.bf16.msra.mxu0 %v886
    %1435 = vmatpush.bf16.msra.mxu0 %v882
    %1436 = vmatpush.bf16.msra.mxu0 %v878
    %1437 = vmatpush.bf16.msra.mxu0 %v874
    %1438 = vmatpush.bf16.msra.mxu0 %v870
    %1439 = vmatpush.bf16.msra.mxu0 %v866
    %1440 = vmatpush.bf16.msra.mxu0 %v862
    %1441 = vmatpush.bf16.msra.mxu0 %v858
    %1442 = vmatmul.bf16.gmra.mxu0 %v55
    %v1443 = vpop.f32.mrf.mxu0
    %v1444 = vadd.f32 %v262, %v1443
    %v1445 = vpop.f32.mrf.mxu0
    %1446 = vdwg.mxu0
    %1447 = vmatpush.bf16.msra.mxu0 %v918
    %1448 = vmatpush.bf16.msra.mxu0 %v914
    %1449 = vmatpush.bf16.msra.mxu0 %v910
    %1450 = vmatpush.bf16.msra.mxu0 %v906
    %1451 = vmatpush.bf16.msra.mxu0 %v902
    %1452 = vmatpush.bf16.msra.mxu0 %v898
    %1453 = vmatpush.bf16.msra.mxu0 %v894
    %1454 = vmatpush.bf16.msra.mxu0 %v890
    %1455 = vmatmul.bf16.gmra.mxu0 %v56
    %v1456 = vpop.f32.mrf.mxu0
    %v1457 = vadd.f32 %v1444, %v1456
    %v1458 = vpop.f32.mrf.mxu0
    %1459 = vdwg.mxu0
    %1460 = vmatpush.bf16.msra.mxu0 %v950
    %1461 = vmatpush.bf16.msra.mxu0 %v946
    %1462 = vmatpush.bf16.msra.mxu0 %v942
    %1463 = vmatpush.bf16.msra.mxu0 %v938
    %1464 = vmatpush.bf16.msra.mxu0 %v934
    %1465 = vmatpush.bf16.msra.mxu0 %v930
    %1466 = vmatpush.bf16.msra.mxu0 %v926
    %1467 = vmatpush.bf16.msra.mxu0 %v922
    %1468 = vmatmul.bf16.gmra.mxu0 %v57
    %v1469 = vpop.f32.mrf.mxu0
    %v1470 = vadd.f32 %v1457, %v1469
    %v1471 = vpop.f32.mrf.mxu0
    %1472 = vdwg.mxu0
    %1473 = vmatpush.bf16.msra.mxu0 %v982
    %1474 = vmatpush.bf16.msra.mxu0 %v978
    %1475 = vmatpush.bf16.msra.mxu0 %v974
    %1476 = vmatpush.bf16.msra.mxu0 %v970
    %1477 = vmatpush.bf16.msra.mxu0 %v966
    %1478 = vmatpush.bf16.msra.mxu0 %v962
    %1479 = vmatpush.bf16.msra.mxu0 %v958
    %1480 = vmatpush.bf16.msra.mxu0 %v954
    %1481 = vmatmul.bf16.gmra.mxu0 %v58
    %v1482 = vpop.f32.mrf.mxu0
    %v1483 = vadd.f32 %v1470, %v1482
    %v1484 = vpop.f32.mrf.mxu0
    %1485 = vdwg.mxu0
    %1486 = vmatpush.bf16.msra.mxu0 %v1014
    %1487 = vmatpush.bf16.msra.mxu0 %v1010
    %1488 = vmatpush.bf16.msra.mxu0 %v1006
    %1489 = vmatpush.bf16.msra.mxu0 %v1002
    %1490 = vmatpush.bf16.msra.mxu0 %v998
    %1491 = vmatpush.bf16.msra.mxu0 %v994
    %1492 = vmatpush.bf16.msra.mxu0 %v990
    %1493 = vmatpush.bf16.msra.mxu0 %v986
    %1494 = vmatmul.bf16.gmra.mxu0 %v59
    %v1495 = vpop.f32.mrf.mxu0
    %v1496 = vadd.f32 %v1483, %v1495
    %v1497 = vpop.f32.mrf.mxu0
    %1498 = vdwg.mxu0
    %1499 = vmatpush.bf16.msra.mxu0 %v1046
    %1500 = vmatpush.bf16.msra.mxu0 %v1042
    %1501 = vmatpush.bf16.msra.mxu0 %v1038
    %1502 = vmatpush.bf16.msra.mxu0 %v1034
    %1503 = vmatpush.bf16.msra.mxu0 %v1030
    %1504 = vmatpush.bf16.msra.mxu0 %v1026
    %1505 = vmatpush.bf16.msra.mxu0 %v1022
    %1506 = vmatpush.bf16.msra.mxu0 %v1018
    %1507 = vmatmul.bf16.gmra.mxu0 %v60
    %v1508 = vpop.f32.mrf.mxu0
    %v1509 = vadd.f32 %v1496, %v1508
    %v1510 = vpop.f32.mrf.mxu0
    %1511 = vdwg.mxu0
    %1512 = vmatpush.bf16.msra.mxu0 0
    %1513 = vmatpush.bf16.msra.mxu0 0
    %1514 = vmatpush.bf16.msra.mxu0 0
    %1515 = vmatpush.bf16.msra.mxu0 0
    %1516 = vmatpush.bf16.msra.mxu0 0
    %1517 = vmatpush.bf16.msra.mxu0 0
    %1518 = vmatpush.bf16.msra.mxu0 0
    %1519 = vmatpush.bf16.msra.mxu0 %v1050
    %1520 = vmatmul.bf16.gmra.mxu0 %v1250
    %v1521 = vpop.f32.mrf.mxu0
    %v1522 = vadd.f32 %v1509, %v1521
    %v1523 = vpop.f32.mrf.mxu0
    %1524 = vdwg.mxu0
    %1525 = vmatpush.bf16.msra.mxu0 %v887
    %1526 = vmatpush.bf16.msra.mxu0 %v883
    %1527 = vmatpush.bf16.msra.mxu0 %v879
    %1528 = vmatpush.bf16.msra.mxu0 %v875
    %1529 = vmatpush.bf16.msra.mxu0 %v871
    %1530 = vmatpush.bf16.msra.mxu0 %v867
    %1531 = vmatpush.bf16.msra.mxu0 %v863
    %1532 = vmatpush.bf16.msra.mxu0 %v859
    %1533 = vmatmul.bf16.gmra.mxu0 %v55
    %v1534 = vpop.f32.mrf.mxu0
    %v1535 = vadd.f32 %v263, %v1534
    %v1536 = vpop.f32.mrf.mxu0
    %1537 = vdwg.mxu0
    %1538 = vmatpush.bf16.msra.mxu0 %v919
    %1539 = vmatpush.bf16.msra.mxu0 %v915
    %1540 = vmatpush.bf16.msra.mxu0 %v911
    %1541 = vmatpush.bf16.msra.mxu0 %v907
    %1542 = vmatpush.bf16.msra.mxu0 %v903
    %1543 = vmatpush.bf16.msra.mxu0 %v899
    %1544 = vmatpush.bf16.msra.mxu0 %v895
    %1545 = vmatpush.bf16.msra.mxu0 %v891
    %1546 = vmatmul.bf16.gmra.mxu0 %v56
    %v1547 = vpop.f32.mrf.mxu0
    %v1548 = vadd.f32 %v1535, %v1547
    %v1549 = vpop.f32.mrf.mxu0
    %1550 = vdwg.mxu0
    %1551 = vmatpush.bf16.msra.mxu0 %v951
    %1552 = vmatpush.bf16.msra.mxu0 %v947
    %1553 = vmatpush.bf16.msra.mxu0 %v943
    %1554 = vmatpush.bf16.msra.mxu0 %v939
    %1555 = vmatpush.bf16.msra.mxu0 %v935
    %1556 = vmatpush.bf16.msra.mxu0 %v931
    %1557 = vmatpush.bf16.msra.mxu0 %v927
    %1558 = vmatpush.bf16.msra.mxu0 %v923
    %1559 = vmatmul.bf16.gmra.mxu0 %v57
    %v1560 = vpop.f32.mrf.mxu0
    %v1561 = vadd.f32 %v1548, %v1560
    %v1562 = vpop.f32.mrf.mxu0
    %1563 = vdwg.mxu0
    %1564 = vmatpush.bf16.msra.mxu0 %v983
    %1565 = vmatpush.bf16.msra.mxu0 %v979
    %1566 = vmatpush.bf16.msra.mxu0 %v975
    %1567 = vmatpush.bf16.msra.mxu0 %v971
    %1568 = vmatpush.bf16.msra.mxu0 %v967
    %1569 = vmatpush.bf16.msra.mxu0 %v963
    %1570 = vmatpush.bf16.msra.mxu0 %v959
    %1571 = vmatpush.bf16.msra.mxu0 %v955
    %1572 = vmatmul.bf16.gmra.mxu0 %v58
    %v1573 = vpop.f32.mrf.mxu0
    %v1574 = vadd.f32 %v1561, %v1573
    %v1575 = vpop.f32.mrf.mxu0
    %1576 = vdwg.mxu0
    %1577 = vmatpush.bf16.msra.mxu0 %v1015
    %1578 = vmatpush.bf16.msra.mxu0 %v1011
    %1579 = vmatpush.bf16.msra.mxu0 %v1007
    %1580 = vmatpush.bf16.msra.mxu0 %v1003
    %1581 = vmatpush.bf16.msra.mxu0 %v999
    %1582 = vmatpush.bf16.msra.mxu0 %v995
    %1583 = vmatpush.bf16.msra.mxu0 %v991
    %1584 = vmatpush.bf16.msra.mxu0 %v987
    %1585 = vmatmul.bf16.gmra.mxu0 %v59
    %v1586 = vpop.f32.mrf.mxu0
    %v1587 = vadd.f32 %v1574, %v1586
    %v1588 = vpop.f32.mrf.mxu0
    %1589 = vdwg.mxu0
    %1590 = vmatpush.bf16.msra.mxu0 %v1047
    %1591 = vmatpush.bf16.msra.mxu0 %v1043
    %1592 = vmatpush.bf16.msra.mxu0 %v1039
    %1593 = vmatpush.bf16.msra.mxu0 %v1035
    %1594 = vmatpush.bf16.msra.mxu0 %v1031
    %1595 = vmatpush.bf16.msra.mxu0 %v1027
    %1596 = vmatpush.bf16.msra.mxu0 %v1023
    %1597 = vmatpush.bf16.msra.mxu0 %v1019
    %1598 = vmatmul.bf16.gmra.mxu0 %v60
    %v1599 = vpop.f32.mrf.mxu0
    %v1600 = vadd.f32 %v1587, %v1599
    %v1601 = vpop.f32.mrf.mxu0
    %1602 = vdwg.mxu0
    %1603 = vmatpush.bf16.msra.mxu0 0
    %1604 = vmatpush.bf16.msra.mxu0 0
    %1605 = vmatpush.bf16.msra.mxu0 0
    %1606 = vmatpush.bf16.msra.mxu0 0
    %1607 = vmatpush.bf16.msra.mxu0 0
    %1608 = vmatpush.bf16.msra.mxu0 0
    %1609 = vmatpush.bf16.msra.mxu0 0
    %1610 = vmatpush.bf16.msra.mxu0 %v1051
    %1611 = vmatmul.bf16.gmra.mxu0 %v1250
    %v1612 = vpop.f32.mrf.mxu0
    %v1613 = vadd.f32 %v1600, %v1612
    %v1614 = vpop.f32.mrf.mxu0
    %1615 = vdwg.mxu0
    %v1616 = vmax.f32 %v1340, 0.0
    %v1617 = vmax.f32 %v1431, 0.0
    %v1618 = vmax.f32 %v1522, 0.0
    %v1619 = vmax.f32 %v1613, 0.0
    %v1620 = vpack.c.bf16 %v1616, %v1616
    %v1621 = vpack.c.bf16 %v1617, %v1617
    %v1622 = vpack.c.bf16 %v1618, %v1618
    %v1623 = vpack.c.bf16 %v1619, %v1619
    %v1624 = vld [vmem:[%s3] sm:$0xff]
    %v1625 = vld [vmem:[%s3 + $0x8] sm:$0xff]
    %v1626 = vld [vmem:[%s3 + $0x10] sm:$0xff]
    %v1627 = vld [vmem:[%s3 + $0x18] sm:$0xff]
    %v1628 = vld [vmem:[%s3 + $0x20] sm:$0xff]
    %v1629 = vld [vmem:[%s3 + $0x28] sm:$0xff]
    %v1630 = vld [vmem:[%s3 + $0x30] sm:$0xff]
    %v1631 = vld [vmem:[%s3 + $0x38] sm:$0xff]
    %v1632 = vld [vmem:[%s3 + $0x40] sm:$0xff]
    %v1633 = vld [vmem:[%s3 + $0x48] sm:$0xff]
    %v1634 = vld [vmem:[%s3 + $0x50] sm:$0xff]
    %v1635 = vld [vmem:[%s3 + $0x58] sm:$0xff]
    %v1636 = vld [vmem:[%s3 + $0x60] sm:$0xff]
    %v1637 = vld [vmem:[%s3 + $0x68] sm:$0xff]
    %v1638 = vld [vmem:[%s3 + $0x70] sm:$0xff]
    %v1639 = vld [vmem:[%s3 + $0x78] sm:$0xff]
    %v1640 = vld [vmem:[%s3 + $0x80] sm:$0xff]
    %v1641 = vld [vmem:[%s3 + $0x88] sm:$0xff]
    %v1642 = vld [vmem:[%s3 + $0x90] sm:$0xff]
    %v1643 = vld [vmem:[%s3 + $0x98] sm:$0xff]
    %v1644 = vld [vmem:[%s3 + $0xa0] sm:$0xff]
    %v1645 = vld [vmem:[%s3 + $0xa8] sm:$0xff]
    %v1646 = vld [vmem:[%s3 + $0xb0] sm:$0xff]
    %v1647 = vld [vmem:[%s3 + $0xb8] sm:$0xff]
    %v1648 = vld [vmem:[%s3 + $0xc0] sm:$0xff]
    %v1649 = vld [vmem:[%s3 + $0xc8] sm:$0xff]
    %v1650 = vld [vmem:[%s3 + $0xd0] sm:$0xff]
    %v1651 = vld [vmem:[%s3 + $0xd8] sm:$0xff]
    %v1652 = vld [vmem:[%s3 + $0xe0] sm:$0xff]
    %v1653 = vld [vmem:[%s3 + $0xe8] sm:$0xff]
    %v1654 = vld [vmem:[%s3 + $0xf0] sm:$0xff]
    %v1655 = vld [vmem:[%s3 + $0xf8] sm:$0xff]
    %v1656 = vld [vmem:[%s3 + $0x100] sm:$0xff]
    %v1657 = vld [vmem:[%s3 + $0x108] sm:$0xff]
    %v1658 = vld [vmem:[%s3 + $0x110] sm:$0xff]
    %v1659 = vld [vmem:[%s3 + $0x118] sm:$0xff]
    %v1660 = vld [vmem:[%s3 + $0x120] sm:$0xff]
    %v1661 = vld [vmem:[%s3 + $0x128] sm:$0xff]
    %v1662 = vld [vmem:[%s3 + $0x130] sm:$0xff]
    %v1663 = vld [vmem:[%s3 + $0x138] sm:$0xff]
    %v1664 = vld [vmem:[%s3 + $0x140] sm:$0xff]
    %v1665 = vld [vmem:[%s3 + $0x148] sm:$0xff]
    %v1666 = vld [vmem:[%s3 + $0x150] sm:$0xff]
    %v1667 = vld [vmem:[%s3 + $0x158] sm:$0xff]
    %v1668 = vld [vmem:[%s3 + $0x160] sm:$0xff]
    %v1669 = vld [vmem:[%s3 + $0x168] sm:$0xff]
    %v1670 = vld [vmem:[%s3 + $0x170] sm:$0xff]
    %v1671 = vld [vmem:[%s3 + $0x178] sm:$0xff]
    %v1672 = vld [vmem:[%s3 + $0x180] sm:$0xff]
    %v1673 = vld [vmem:[%s3 + $0x188] sm:$0xff]
    %v1674 = vld [vmem:[%s3 + $0x190] sm:$0xff]
    %v1675 = vld [vmem:[%s3 + $0x198] sm:$0xff]
    %v1676 = vld [vmem:[%s3 + $0x1a0] sm:$0xff]
    %v1677 = vld [vmem:[%s3 + $0x1a8] sm:$0xff]
    %v1678 = vld [vmem:[%s3 + $0x1b0] sm:$0xff]
    %v1679 = vld [vmem:[%s3 + $0x1b8] sm:$0xff]
    %v1680 = vld [vmem:[%s3 + $0x1c0] sm:$0xff]
    %v1681 = vld [vmem:[%s3 + $0x1c8] sm:$0xff]
    %v1682 = vld [vmem:[%s3 + $0x1d0] sm:$0xff]
    %v1683 = vld [vmem:[%s3 + $0x1d8] sm:$0xff]
    %v1684 = vld [vmem:[%s3 + $0x1e0] sm:$0xff]
    %v1685 = vld [vmem:[%s3 + $0x1e8] sm:$0xff]
    %v1686 = vld [vmem:[%s3 + $0x1f0] sm:$0xff]
    %v1687 = vld [vmem:[%s3 + $0x1f8] sm:$0xff]
    %v1688 = vld [vmem:[%s4] sm:$0x3]
    %v1690 = vperm.slane %v1688, 0
    %v1691 = vperm.slane %v1688, 1
    %v1758 = vunpack.c.l.b16 %v1624
    %v1759 = vunpack.c.h.b16 %v1624
    %v1760 = vunpack.c.l.b16 %v1625
    %v1761 = vunpack.c.h.b16 %v1625
    %v1762 = vunpack.c.l.b16 %v1626
    %v1763 = vunpack.c.h.b16 %v1626
    %v1764 = vunpack.c.l.b16 %v1627
    %v1765 = vunpack.c.h.b16 %v1627
    %v1766 = vunpack.c.l.b16 %v1628
    %v1767 = vunpack.c.h.b16 %v1628
    %v1768 = vunpack.c.l.b16 %v1629
    %v1769 = vunpack.c.h.b16 %v1629
    %v1770 = vunpack.c.l.b16 %v1630
    %v1771 = vunpack.c.h.b16 %v1630
    %v1772 = vunpack.c.l.b16 %v1631
    %v1773 = vunpack.c.h.b16 %v1631
    %v1774 = vunpack.c.l.b16 %v1632
    %v1775 = vunpack.c.h.b16 %v1632
    %v1776 = vunpack.c.l.b16 %v1633
    %v1777 = vunpack.c.h.b16 %v1633
    %v1778 = vunpack.c.l.b16 %v1634
    %v1779 = vunpack.c.h.b16 %v1634
    %v1780 = vunpack.c.l.b16 %v1635
    %v1781 = vunpack.c.h.b16 %v1635
    %v1782 = vunpack.c.l.b16 %v1636
    %v1783 = vunpack.c.h.b16 %v1636
    %v1784 = vunpack.c.l.b16 %v1637
    %v1785 = vunpack.c.h.b16 %v1637
    %v1786 = vunpack.c.l.b16 %v1638
    %v1787 = vunpack.c.h.b16 %v1638
    %v1788 = vunpack.c.l.b16 %v1639
    %v1789 = vunpack.c.h.b16 %v1639
    %v1790 = vunpack.c.l.b16 %v1640
    %v1791 = vunpack.c.h.b16 %v1640
    %v1792 = vunpack.c.l.b16 %v1641
    %v1793 = vunpack.c.h.b16 %v1641
    %v1794 = vunpack.c.l.b16 %v1642
    %v1795 = vunpack.c.h.b16 %v1642
    %v1796 = vunpack.c.l.b16 %v1643
    %v1797 = vunpack.c.h.b16 %v1643
    %v1798 = vunpack.c.l.b16 %v1644
    %v1799 = vunpack.c.h.b16 %v1644
    %v1800 = vunpack.c.l.b16 %v1645
    %v1801 = vunpack.c.h.b16 %v1645
    %v1802 = vunpack.c.l.b16 %v1646
    %v1803 = vunpack.c.h.b16 %v1646
    %v1804 = vunpack.c.l.b16 %v1647
    %v1805 = vunpack.c.h.b16 %v1647
    %v1806 = vunpack.c.l.b16 %v1648
    %v1807 = vunpack.c.h.b16 %v1648
    %v1808 = vunpack.c.l.b16 %v1649
    %v1809 = vunpack.c.h.b16 %v1649
    %v1810 = vunpack.c.l.b16 %v1650
    %v1811 = vunpack.c.h.b16 %v1650
    %v1812 = vunpack.c.l.b16 %v1651
    %v1813 = vunpack.c.h.b16 %v1651
    %v1814 = vunpack.c.l.b16 %v1652
    %v1815 = vunpack.c.h.b16 %v1652
    %v1816 = vunpack.c.l.b16 %v1653
    %v1817 = vunpack.c.h.b16 %v1653
    %v1818 = vunpack.c.l.b16 %v1654
    %v1819 = vunpack.c.h.b16 %v1654
    %v1820 = vunpack.c.l.b16 %v1655
    %v1821 = vunpack.c.h.b16 %v1655
    %v1822 = vunpack.c.l.b16 %v1656
    %v1823 = vunpack.c.h.b16 %v1656
    %v1824 = vunpack.c.l.b16 %v1657
    %v1825 = vunpack.c.h.b16 %v1657
    %v1826 = vunpack.c.l.b16 %v1658
    %v1827 = vunpack.c.h.b16 %v1658
    %v1828 = vunpack.c.l.b16 %v1659
    %v1829 = vunpack.c.h.b16 %v1659
    %v1830 = vunpack.c.l.b16 %v1660
    %v1831 = vunpack.c.h.b16 %v1660
    %v1832 = vunpack.c.l.b16 %v1661
    %v1833 = vunpack.c.h.b16 %v1661
    %v1834 = vunpack.c.l.b16 %v1662
    %v1835 = vunpack.c.h.b16 %v1662
    %v1836 = vunpack.c.l.b16 %v1663
    %v1837 = vunpack.c.h.b16 %v1663
    %v1838 = vunpack.c.l.b16 %v1664
    %v1839 = vunpack.c.h.b16 %v1664
    %v1840 = vunpack.c.l.b16 %v1665
    %v1841 = vunpack.c.h.b16 %v1665
    %v1842 = vunpack.c.l.b16 %v1666
    %v1843 = vunpack.c.h.b16 %v1666
    %v1844 = vunpack.c.l.b16 %v1667
    %v1845 = vunpack.c.h.b16 %v1667
    %v1846 = vunpack.c.l.b16 %v1668
    %v1847 = vunpack.c.h.b16 %v1668
    %v1848 = vunpack.c.l.b16 %v1669
    %v1849 = vunpack.c.h.b16 %v1669
    %v1850 = vunpack.c.l.b16 %v1670
    %v1851 = vunpack.c.h.b16 %v1670
    %v1852 = vunpack.c.l.b16 %v1671
    %v1853 = vunpack.c.h.b16 %v1671
    %v1854 = vunpack.c.l.b16 %v1672
    %v1855 = vunpack.c.h.b16 %v1672
    %v1856 = vunpack.c.l.b16 %v1673
    %v1857 = vunpack.c.h.b16 %v1673
    %v1858 = vunpack.c.l.b16 %v1674
    %v1859 = vunpack.c.h.b16 %v1674
    %v1860 = vunpack.c.l.b16 %v1675
    %v1861 = vunpack.c.h.b16 %v1675
    %v1862 = vunpack.c.l.b16 %v1676
    %v1863 = vunpack.c.h.b16 %v1676
    %v1864 = vunpack.c.l.b16 %v1677
    %v1865 = vunpack.c.h.b16 %v1677
    %v1866 = vunpack.c.l.b16 %v1678
    %v1867 = vunpack.c.h.b16 %v1678
    %v1868 = vunpack.c.l.b16 %v1679
    %v1869 = vunpack.c.h.b16 %v1679
    %v1870 = vunpack.c.l.b16 %v1680
    %v1871 = vunpack.c.h.b16 %v1680
    %v1872 = vunpack.c.l.b16 %v1681
    %v1873 = vunpack.c.h.b16 %v1681
    %v1874 = vunpack.c.l.b16 %v1682
    %v1875 = vunpack.c.h.b16 %v1682
    %v1876 = vunpack.c.l.b16 %v1683
    %v1877 = vunpack.c.h.b16 %v1683
    %v1878 = vunpack.c.l.b16 %v1684
    %v1879 = vunpack.c.h.b16 %v1684
    %v1880 = vunpack.c.l.b16 %v1685
    %v1881 = vunpack.c.h.b16 %v1685
    %v1882 = vunpack.c.l.b16 %v1686
    %v1883 = vunpack.c.h.b16 %v1686
    %v1884 = vunpack.c.l.b16 %v1687
    %v1885 = vunpack.c.h.b16 %v1687
    %v1886 = vpack.c.b16 %v1760, %v1758
    %v1887 = vpack.c.b16 %v1761, %v1759
    %v1888 = vpack.c.b16 %v1764, %v1762
    %v1889 = vpack.c.b16 %v1765, %v1763
    %v1890 = vpack.c.b16 %v1768, %v1766
    %v1891 = vpack.c.b16 %v1769, %v1767
    %v1892 = vpack.c.b16 %v1772, %v1770
    %v1893 = vpack.c.b16 %v1773, %v1771
    %v1894 = vpack.c.b16 %v1776, %v1774
    %v1895 = vpack.c.b16 %v1777, %v1775
    %v1896 = vpack.c.b16 %v1780, %v1778
    %v1897 = vpack.c.b16 %v1781, %v1779
    %v1898 = vpack.c.b16 %v1784, %v1782
    %v1899 = vpack.c.b16 %v1785, %v1783
    %v1900 = vpack.c.b16 %v1788, %v1786
    %v1901 = vpack.c.b16 %v1789, %v1787
    %v1902 = vpack.c.b16 %v1792, %v1790
    %v1903 = vpack.c.b16 %v1793, %v1791
    %v1904 = vpack.c.b16 %v1796, %v1794
    %v1905 = vpack.c.b16 %v1797, %v1795
    %v1906 = vpack.c.b16 %v1800, %v1798
    %v1907 = vpack.c.b16 %v1801, %v1799
    %v1908 = vpack.c.b16 %v1804, %v1802
    %v1909 = vpack.c.b16 %v1805, %v1803
    %v1910 = vpack.c.b16 %v1808, %v1806
    %v1911 = vpack.c.b16 %v1809, %v1807
    %v1912 = vpack.c.b16 %v1812, %v1810
    %v1913 = vpack.c.b16 %v1813, %v1811
    %v1914 = vpack.c.b16 %v1816, %v1814
    %v1915 = vpack.c.b16 %v1817, %v1815
    %v1916 = vpack.c.b16 %v1820, %v1818
    %v1917 = vpack.c.b16 %v1821, %v1819
    %v1918 = vpack.c.b16 %v1824, %v1822
    %v1919 = vpack.c.b16 %v1825, %v1823
    %v1920 = vpack.c.b16 %v1828, %v1826
    %v1921 = vpack.c.b16 %v1829, %v1827
    %v1922 = vpack.c.b16 %v1832, %v1830
    %v1923 = vpack.c.b16 %v1833, %v1831
    %v1924 = vpack.c.b16 %v1836, %v1834
    %v1925 = vpack.c.b16 %v1837, %v1835
    %v1926 = vpack.c.b16 %v1840, %v1838
    %v1927 = vpack.c.b16 %v1841, %v1839
    %v1928 = vpack.c.b16 %v1844, %v1842
    %v1929 = vpack.c.b16 %v1845, %v1843
    %v1930 = vpack.c.b16 %v1848, %v1846
    %v1931 = vpack.c.b16 %v1849, %v1847
    %v1932 = vpack.c.b16 %v1852, %v1850
    %v1933 = vpack.c.b16 %v1853, %v1851
    %v1934 = vpack.c.b16 %v1856, %v1854
    %v1935 = vpack.c.b16 %v1857, %v1855
    %v1936 = vpack.c.b16 %v1860, %v1858
    %v1937 = vpack.c.b16 %v1861, %v1859
    %v1938 = vpack.c.b16 %v1864, %v1862
    %v1939 = vpack.c.b16 %v1865, %v1863
    %v1940 = vpack.c.b16 %v1868, %v1866
    %v1941 = vpack.c.b16 %v1869, %v1867
    %v1942 = vpack.c.b16 %v1872, %v1870
    %v1943 = vpack.c.b16 %v1873, %v1871
    %v1944 = vpack.c.b16 %v1876, %v1874
    %v1945 = vpack.c.b16 %v1877, %v1875
    %v1946 = vpack.c.b16 %v1880, %v1878
    %v1947 = vpack.c.b16 %v1881, %v1879
    %v1948 = vpack.c.b16 %v1884, %v1882
    %v1949 = vpack.c.b16 %v1885, %v1883
    %2014 = vmatpush.bf16.msra.mxu0 %v1900
    %2015 = vmatpush.bf16.msra.mxu0 %v1898
    %2016 = vmatpush.bf16.msra.mxu0 %v1896
    %2017 = vmatpush.bf16.msra.mxu0 %v1894
    %2018 = vmatpush.bf16.msra.mxu0 %v1892
    %2019 = vmatpush.bf16.msra.mxu0 %v1890
    %2020 = vmatpush.bf16.msra.mxu0 %v1888
    %2021 = vmatpush.bf16.msra.mxu0 %v1886
    %2022 = vmatmul.bf16.gmra.mxu0 %v1620
    %v2023 = vpop.f32.mrf.mxu0
    %v2024 = vadd.f32 %v1690, %v2023
    %v2025 = vpop.f32.mrf.mxu0
    %2026 = vdwg.mxu0
    %2027 = vmatpush.bf16.msra.mxu0 %v1916
    %2028 = vmatpush.bf16.msra.mxu0 %v1914
    %2029 = vmatpush.bf16.msra.mxu0 %v1912
    %2030 = vmatpush.bf16.msra.mxu0 %v1910
    %2031 = vmatpush.bf16.msra.mxu0 %v1908
    %2032 = vmatpush.bf16.msra.mxu0 %v1906
    %2033 = vmatpush.bf16.msra.mxu0 %v1904
    %2034 = vmatpush.bf16.msra.mxu0 %v1902
    %2035 = vmatmul.bf16.gmra.mxu0 %v1621
    %v2036 = vpop.f32.mrf.mxu0
    %v2037 = vadd.f32 %v2024, %v2036
    %v2038 = vpop.f32.mrf.mxu0
    %2039 = vdwg.mxu0
    %2040 = vmatpush.bf16.msra.mxu0 %v1932
    %2041 = vmatpush.bf16.msra.mxu0 %v1930
    %2042 = vmatpush.bf16.msra.mxu0 %v1928
    %2043 = vmatpush.bf16.msra.mxu0 %v1926
    %2044 = vmatpush.bf16.msra.mxu0 %v1924
    %2045 = vmatpush.bf16.msra.mxu0 %v1922
    %2046 = vmatpush.bf16.msra.mxu0 %v1920
    %2047 = vmatpush.bf16.msra.mxu0 %v1918
    %2048 = vmatmul.bf16.gmra.mxu0 %v1622
    %v2049 = vpop.f32.mrf.mxu0
    %v2050 = vadd.f32 %v2037, %v2049
    %v2051 = vpop.f32.mrf.mxu0
    %2052 = vdwg.mxu0
    %2053 = vmatpush.bf16.msra.mxu0 %v1948
    %2054 = vmatpush.bf16.msra.mxu0 %v1946
    %2055 = vmatpush.bf16.msra.mxu0 %v1944
    %2056 = vmatpush.bf16.msra.mxu0 %v1942
    %2057 = vmatpush.bf16.msra.mxu0 %v1940
    %2058 = vmatpush.bf16.msra.mxu0 %v1938
    %2059 = vmatpush.bf16.msra.mxu0 %v1936
    %2060 = vmatpush.bf16.msra.mxu0 %v1934
    %2061 = vmatmul.bf16.gmra.mxu0 %v1623
    %v2062 = vpop.f32.mrf.mxu0
    %v2063 = vadd.f32 %v2050, %v2062
    %v2064 = vpop.f32.mrf.mxu0
    %2065 = vdwg.mxu0
    %2066 = vmatpush.bf16.msra.mxu0 %v1901
    %2067 = vmatpush.bf16.msra.mxu0 %v1899
    %2068 = vmatpush.bf16.msra.mxu0 %v1897
    %2069 = vmatpush.bf16.msra.mxu0 %v1895
    %2070 = vmatpush.bf16.msra.mxu0 %v1893
    %2071 = vmatpush.bf16.msra.mxu0 %v1891
    %2072 = vmatpush.bf16.msra.mxu0 %v1889
    %2073 = vmatpush.bf16.msra.mxu0 %v1887
    %2074 = vmatmul.bf16.gmra.mxu0 %v1620
    %v2075 = vpop.f32.mrf.mxu0
    %v2076 = vadd.f32 %v1691, %v2075
    %v2077 = vpop.f32.mrf.mxu0
    %2078 = vdwg.mxu0
    %2079 = vmatpush.bf16.msra.mxu0 %v1917
    %2080 = vmatpush.bf16.msra.mxu0 %v1915
    %2081 = vmatpush.bf16.msra.mxu0 %v1913
    %2082 = vmatpush.bf16.msra.mxu0 %v1911
    %2083 = vmatpush.bf16.msra.mxu0 %v1909
    %2084 = vmatpush.bf16.msra.mxu0 %v1907
    %2085 = vmatpush.bf16.msra.mxu0 %v1905
    %2086 = vmatpush.bf16.msra.mxu0 %v1903
    %2087 = vmatmul.bf16.gmra.mxu0 %v1621
    %v2088 = vpop.f32.mrf.mxu0
    %v2089 = vadd.f32 %v2076, %v2088
    %v2090 = vpop.f32.mrf.mxu0
    %2091 = vdwg.mxu0
    %2092 = vmatpush.bf16.msra.mxu0 %v1933
    %2093 = vmatpush.bf16.msra.mxu0 %v1931
    %2094 = vmatpush.bf16.msra.mxu0 %v1929
    %2095 = vmatpush.bf16.msra.mxu0 %v1927
    %2096 = vmatpush.bf16.msra.mxu0 %v1925
    %2097 = vmatpush.bf16.msra.mxu0 %v1923
    %2098 = vmatpush.bf16.msra.mxu0 %v1921
    %2099 = vmatpush.bf16.msra.mxu0 %v1919
    %2100 = vmatmul.bf16.gmra.mxu0 %v1622
    %v2101 = vpop.f32.mrf.mxu0
    %v2102 = vadd.f32 %v2089, %v2101
    %v2103 = vpop.f32.mrf.mxu0
    %2104 = vdwg.mxu0
    %2105 = vmatpush.bf16.msra.mxu0 %v1949
    %2106 = vmatpush.bf16.msra.mxu0 %v1947
    %2107 = vmatpush.bf16.msra.mxu0 %v1945
    %2108 = vmatpush.bf16.msra.mxu0 %v1943
    %2109 = vmatpush.bf16.msra.mxu0 %v1941
    %2110 = vmatpush.bf16.msra.mxu0 %v1939
    %2111 = vmatpush.bf16.msra.mxu0 %v1937
    %2112 = vmatpush.bf16.msra.mxu0 %v1935
    %2113 = vmatmul.bf16.gmra.mxu0 %v1623
    %v2114 = vpop.f32.mrf.mxu0
    %v2115 = vadd.f32 %v2102, %v2114
    %v2116 = vpop.f32.mrf.mxu0
    %2117 = vdwg.mxu0
    %v2118 = vmax.f32 %v2063, 0.0
    %v2119 = vmax.f32 %v2115, 0.0
    %v2120 = vpack.c.bf16 %v2118, %v2118
    %v2121 = vpack.c.bf16 %v2119, %v2119
    %v2122 = vld [vmem:[%s5] sm:$0xf]
    %v2123 = vld [vmem:[%s5 + $0x4] sm:$0xf]
    %v2124 = vld [vmem:[%s5 + $0x8] sm:$0xf]
    %v2125 = vld [vmem:[%s5 + $0xc] sm:$0xf]
    %v2126 = vld [vmem:[%s5 + $0x10] sm:$0xf]
    %v2127 = vld [vmem:[%s5 + $0x14] sm:$0xf]
    %v2128 = vld [vmem:[%s5 + $0x18] sm:$0xf]
    %v2129 = vld [vmem:[%s5 + $0x1c] sm:$0xf]
    %v2130 = vld [vmem:[%s5 + $0x20] sm:$0xf]
    %v2131 = vld [vmem:[%s5 + $0x24] sm:$0xf]
    %v2132 = vld [vmem:[%s5 + $0x28] sm:$0xf]
    %v2133 = vld [vmem:[%s5 + $0x2c] sm:$0xf]
    %v2134 = vld [vmem:[%s5 + $0x30] sm:$0xf]
    %v2135 = vld [vmem:[%s5 + $0x34] sm:$0xf]
    %v2136 = vld [vmem:[%s5 + $0x38] sm:$0xf]
    %v2137 = vld [vmem:[%s5 + $0x3c] sm:$0xf]
    %v2138 = vld [vmem:[%s5 + $0x40] sm:$0xf]
    %v2139 = vld [vmem:[%s5 + $0x44] sm:$0xf]
    %v2140 = vld [vmem:[%s5 + $0x48] sm:$0xf]
    %v2141 = vld [vmem:[%s5 + $0x4c] sm:$0xf]
    %v2142 = vld [vmem:[%s5 + $0x50] sm:$0xf]
    %v2143 = vld [vmem:[%s5 + $0x54] sm:$0xf]
    %v2144 = vld [vmem:[%s5 + $0x58] sm:$0xf]
    %v2145 = vld [vmem:[%s5 + $0x5c] sm:$0xf]
    %v2146 = vld [vmem:[%s5 + $0x60] sm:$0xf]
    %v2147 = vld [vmem:[%s5 + $0x64] sm:$0xf]
    %v2148 = vld [vmem:[%s5 + $0x68] sm:$0xf]
    %v2149 = vld [vmem:[%s5 + $0x6c] sm:$0xf]
    %v2150 = vld [vmem:[%s5 + $0x70] sm:$0xf]
    %v2151 = vld [vmem:[%s5 + $0x74] sm:$0xf]
    %v2152 = vld [vmem:[%s5 + $0x78] sm:$0xf]
    %v2153 = vld [vmem:[%s5 + $0x7c] sm:$0xf]
    %v2154 = vld [vmem:[%s6] sm:$0x1]
    %v2156 = vperm.slane %v2154, 0
    %v2190 = vunpack.c.l.b16 %v2122
    %v2191 = vunpack.c.l.b16 %v2123
    %v2192 = vunpack.c.l.b16 %v2124
    %v2193 = vunpack.c.l.b16 %v2125
    %v2194 = vunpack.c.l.b16 %v2126
    %v2195 = vunpack.c.l.b16 %v2127
    %v2196 = vunpack.c.l.b16 %v2128
    %v2197 = vunpack.c.l.b16 %v2129
    %v2198 = vunpack.c.l.b16 %v2130
    %v2199 = vunpack.c.l.b16 %v2131
    %v2200 = vunpack.c.l.b16 %v2132
    %v2201 = vunpack.c.l.b16 %v2133
    %v2202 = vunpack.c.l.b16 %v2134
    %v2203 = vunpack.c.l.b16 %v2135
    %v2204 = vunpack.c.l.b16 %v2136
    %v2205 = vunpack.c.l.b16 %v2137
    %v2206 = vunpack.c.l.b16 %v2138
    %v2207 = vunpack.c.l.b16 %v2139
    %v2208 = vunpack.c.l.b16 %v2140
    %v2209 = vunpack.c.l.b16 %v2141
    %v2210 = vunpack.c.l.b16 %v2142
    %v2211 = vunpack.c.l.b16 %v2143
    %v2212 = vunpack.c.l.b16 %v2144
    %v2213 = vunpack.c.l.b16 %v2145
    %v2214 = vunpack.c.l.b16 %v2146
    %v2215 = vunpack.c.l.b16 %v2147
    %v2216 = vunpack.c.l.b16 %v2148
    %v2217 = vunpack.c.l.b16 %v2149
    %v2218 = vunpack.c.l.b16 %v2150
    %v2219 = vunpack.c.l.b16 %v2151
    %v2220 = vunpack.c.l.b16 %v2152
    %v2221 = vunpack.c.l.b16 %v2153
    %v2222 = vpack.c.b16 %v2191, %v2190
    %v2223 = vpack.c.b16 %v2193, %v2192
    %v2224 = vpack.c.b16 %v2195, %v2194
    %v2225 = vpack.c.b16 %v2197, %v2196
    %v2226 = vpack.c.b16 %v2199, %v2198
    %v2227 = vpack.c.b16 %v2201, %v2200
    %v2228 = vpack.c.b16 %v2203, %v2202
    %v2229 = vpack.c.b16 %v2205, %v2204
    %v2230 = vpack.c.b16 %v2207, %v2206
    %v2231 = vpack.c.b16 %v2209, %v2208
    %v2232 = vpack.c.b16 %v2211, %v2210
    %v2233 = vpack.c.b16 %v2213, %v2212
    %v2234 = vpack.c.b16 %v2215, %v2214
    %v2235 = vpack.c.b16 %v2217, %v2216
    %v2236 = vpack.c.b16 %v2219, %v2218
    %v2237 = vpack.c.b16 %v2221, %v2220
    %2254 = vmatpush.bf16.msra.mxu0 %v2229
    %2255 = vmatpush.bf16.msra.mxu0 %v2228
    %2256 = vmatpush.bf16.msra.mxu0 %v2227
    %2257 = vmatpush.bf16.msra.mxu0 %v2226
    %2258 = vmatpush.bf16.msra.mxu0 %v2225
    %2259 = vmatpush.bf16.msra.mxu0 %v2224
    %2260 = vmatpush.bf16.msra.mxu0 %v2223
    %2261 = vmatpush.bf16.msra.mxu0 %v2222
    %2262 = vmatmul.bf16.gmra.mxu0 %v2120
    %v2263 = vpop.f32.mrf.mxu0
    %v2264 = vadd.f32 %v2156, %v2263
    %v2265 = vpop.f32.mrf.mxu0
    %2266 = vdwg.mxu0
    %2267 = vmatpush.bf16.msra.mxu0 %v2237
    %2268 = vmatpush.bf16.msra.mxu0 %v2236
    %2269 = vmatpush.bf16.msra.mxu0 %v2235
    %2270 = vmatpush.bf16.msra.mxu0 %v2234
    %2271 = vmatpush.bf16.msra.mxu0 %v2233
    %2272 = vmatpush.bf16.msra.mxu0 %v2232
    %2273 = vmatpush.bf16.msra.mxu0 %v2231
    %2274 = vmatpush.bf16.msra.mxu0 %v2230
    %2275 = vmatmul.bf16.gmra.mxu0 %v2121
    %v2276 = vpop.f32.mrf.mxu0
    %v2277 = vadd.f32 %v2264, %v2276
    %v2278 = vpop.f32.mrf.mxu0
    %2279 = vdwg.mxu0
    %v2280 = vmax.f32 %v2277, 0.0
    %v2281 = vpack.c.bf16 %v2280, %v2280
    %v2282 = vld [vmem:[%s7] sm:$0xf]
    %v2283 = vld [vmem:[%s7 + $0x4] sm:$0xf]
    %v2284 = vld [vmem:[%s7 + $0x8] sm:$0xf]
    %v2285 = vld [vmem:[%s7 + $0xc] sm:$0xf]
    %v2286 = vld [vmem:[%s7 + $0x10] sm:$0xf]
    %v2287 = vld [vmem:[%s7 + $0x14] sm:$0xf]
    %v2288 = vld [vmem:[%s7 + $0x18] sm:$0xf]
    %v2289 = vld [vmem:[%s7 + $0x1c] sm:$0xf]
    %v2290 = vld [vmem:[%s7 + $0x20] sm:$0xf]
    %v2291 = vld [vmem:[%s7 + $0x24] sm:$0xf]
    %v2292 = vld [vmem:[%s7 + $0x28] sm:$0xf]
    %v2293 = vld [vmem:[%s7 + $0x2c] sm:$0xf]
    %v2294 = vld [vmem:[%s7 + $0x30] sm:$0xf]
    %v2295 = vld [vmem:[%s7 + $0x34] sm:$0xf]
    %v2296 = vld [vmem:[%s7 + $0x38] sm:$0xf]
    %v2297 = vld [vmem:[%s7 + $0x3c] sm:$0xf]
    %v2298 = vld [vmem:[%s8] sm:$0x1]
    %v2300 = vperm.slane %v2298, 0
    %v2318 = vunpack.c.l.b16 %v2282
    %v2319 = vunpack.c.l.b16 %v2283
    %v2320 = vunpack.c.l.b16 %v2284
    %v2321 = vunpack.c.l.b16 %v2285
    %v2322 = vunpack.c.l.b16 %v2286
    %v2323 = vunpack.c.l.b16 %v2287
    %v2324 = vunpack.c.l.b16 %v2288
    %v2325 = vunpack.c.l.b16 %v2289
    %v2326 = vunpack.c.l.b16 %v2290
    %v2327 = vunpack.c.l.b16 %v2291
    %v2328 = vunpack.c.l.b16 %v2292
    %v2329 = vunpack.c.l.b16 %v2293
    %v2330 = vunpack.c.l.b16 %v2294
    %v2331 = vunpack.c.l.b16 %v2295
    %v2332 = vunpack.c.l.b16 %v2296
    %v2333 = vunpack.c.l.b16 %v2297
    %v2334 = vpack.c.b16 %v2319, %v2318
    %v2335 = vpack.c.b16 %v2321, %v2320
    %v2336 = vpack.c.b16 %v2323, %v2322
    %v2337 = vpack.c.b16 %v2325, %v2324
    %v2338 = vpack.c.b16 %v2327, %v2326
    %v2339 = vpack.c.b16 %v2329, %v2328
    %v2340 = vpack.c.b16 %v2331, %v2330
    %v2341 = vpack.c.b16 %v2333, %v2332
    %2350 = vmatpush.bf16.msra.mxu0 %v2341
    %2351 = vmatpush.bf16.msra.mxu0 %v2340
    %2352 = vmatpush.bf16.msra.mxu0 %v2339
    %2353 = vmatpush.bf16.msra.mxu0 %v2338
    %2354 = vmatpush.bf16.msra.mxu0 %v2337
    %2355 = vmatpush.bf16.msra.mxu0 %v2336
    %2356 = vmatpush.bf16.msra.mxu0 %v2335
    %2357 = vmatpush.bf16.msra.mxu0 %v2334
    %2358 = vmatmul.bf16.gmra.mxu0 %v2281
    %v2359 = vpop.f32.mrf.mxu0
    %v2360 = vadd.f32 %v2300, %v2359
    %v2361 = vpop.f32.mrf.mxu0
    %2362 = vdwg.mxu0
    %vm2363 = vcmask 1041408
    %v2364 = vsel %vm2363, %v2360, -inf
    %2365 = vmax.xlane.f32.xlu0 %v2364
    %v2366 = vpop.xlane.xlu0 %2365
    %v2367 = vsub.f32 %v2360, %v2366
    %v2368 = vmul.f32 %v2367, 1.442695
    %v2369 = vpow.pop %v2368
    %v2370 = vsel %vm2363, %v2369, 0.0
    %2371 = vadd.xlane.f32.xlu0 %v2370
    %v2372 = vpop.xlane.xlu0 %2371
    %v2373 = vlog2.pop %v2372
    %v2374 = vmul.f32 %v2373, 0.6931472
    %v2375 = vsub.f32 %v2367, %v2374
    %2376 = vst [vmem:[#allocation2] sm:$0x3] %v2375
    // Predicated region
    $region38: #{fcnn_forward.1} parent=1 // pred_check
      _
    $region39: #{fcnn_forward.1} parent=1 // pred_check_branch
      %2378 = sbr.rel (0) target = $region41
    $region40: #{fcnn_forward.1} parent=1 // pred_region
      %2380 = vsyncadd [#allocation3], 0
      %s2382 = sshll.u32 [#allocation2], 4
      %s2383 = int_to_ptr.vmem [resolvable:$true] %s2382
      %s2384 = sshll.u32 %s9, 4
      %s2385 = int_to_ptr.hbm [resolvable:$true] %s2384
      %2387 = dma.vmem_to_hbm [thread:$0]  %s2383, 32, %s2385, [#allocation3]
    $region41: #{fcnn_forward.1} parent=1 // pred_fallthru
      _
    // Predicated region
    $region42: #{fcnn_forward.1} parent=1 // pred_check
      _
    $region43: #{fcnn_forward.1} parent=1 // pred_check_branch
      %2389 = sbr.rel (0) target = $region45
    $region44: #{fcnn_forward.1} parent=1 // pred_region
      %2391 = dma.done [#allocation3], 32
    $region45: #{fcnn_forward.1} parent=1 // pred_fallthru
      _
    %2392 = vsyncpa [#allocation3], 1

</llo_original>
